<compile_context>
chip_gen: v7x
topology: tpu7x:2x2x1
jax: 0.10.0
libtpu: 0.0.40
codegen_flags: <defaults>
</compile_context>

<pallas_src>
import jax
import jax.numpy as jnp
from jax.experimental import pallas as pl
from jax.experimental.pallas import tpu as pltpu


def _make_encoder_kernel(n_layers, S, B, H):
    """Build a kernel for an n_layers stacked LSTM over a length-S sequence."""

    def kernel(x_ref, *refs):
        # refs layout: [w_ih_0, w_hh_0, b_0, ..., w_ih_{L-1}, w_hh_{L-1}, b_{L-1},
        #               hN_ref, cN_ref, seq_scr]
        layer_refs = refs[: 3 * n_layers]
        hN_ref = refs[3 * n_layers]
        cN_ref = refs[3 * n_layers + 1]
        seq_scr = refs[3 * n_layers + 2]          # (S*B, H) VMEM inter-layer buffer

        for l in range(n_layers):
            w_ih = layer_refs[3 * l][...]         # (in_dim, 4H)
            w_hh = layer_refs[3 * l + 1][...]     # (H, 4H)
            b = layer_refs[3 * l + 2][...]        # (1, 4H)

            # Input to this layer for all timesteps, flattened to (S*B, in_dim).
            inp = x_ref[...] if l == 0 else seq_scr[...]

            # Batched input projection + bias for every timestep at once:
            # one large MXU op, off the serial critical path of the recurrence.
            xg = jnp.dot(inp, w_ih, preferred_element_type=jnp.float32) + b   # (S*B, 4H)

            h = jnp.zeros((B, H), jnp.float32)
            c = jnp.zeros((B, H), jnp.float32)

            # Fully unrolled time loop (S static & small): only h @ W_hh remains
            # on the per-step critical path.
            for t in range(S):
                gates = xg[t * B:(t + 1) * B, :] + jnp.dot(
                    h, w_hh, preferred_element_type=jnp.float32)          # (B, 4H)

                # Full-width transcendentals (2 EUP ops), then per-gate slices.
                sig = jax.nn.sigmoid(gates)
                th = jnp.tanh(gates)
                i_g = sig[:, 0 * H:1 * H]
                f_g = sig[:, 1 * H:2 * H]
                g_g = th[:, 2 * H:3 * H]
                o_g = sig[:, 3 * H:4 * H]

                c = f_g * c + i_g * g_g
                h = o_g * jnp.tanh(c)

                if l < n_layers - 1:
                    # Keep intermediate sequence in VMEM only (never hits HBM).
                    seq_scr[t * B:(t + 1) * B, :] = h

            hN_ref[l] = h
            cN_ref[l] = c

    return kernel


def encoder_lstm(x_flat, layers, S, B, H):
    """Run the fused stacked-LSTM kernel.

    x_flat: (S*B, E) float32 embedded inputs (time-major, flattened).
    layers: list of dicts with 'w_ih' (in_dim, 4H), 'w_hh' (H, 4H), 'b' (1, 4H).
    returns: hidden (L, B, H), cell (L, B, H)
    """
    L = len(layers)
    args = [x_flat]
    for layer in layers:
        args += [layer["w_ih"], layer["w_hh"], layer["b"]]

    kernel = _make_encoder_kernel(L, S, B, H)
    vmem_spec = pl.BlockSpec(memory_space=pltpu.MemorySpace.VMEM)

    hidden, cell = pl.pallas_call(
        kernel,
        out_shape=(jax.ShapeDtypeStruct((L, B, H), jnp.float32),
                   jax.ShapeDtypeStruct((L, B, H), jnp.float32)),
        in_specs=[vmem_spec] * len(args),
        out_specs=(vmem_spec, vmem_spec),
        scratch_shapes=[pltpu.VMEM((S * B, H), jnp.float32)],
    )(*args)
    return hidden, cell


def make_encoder_params(key, input_dim=14, emb_dim=16, hid_dim=32, n_layers=2):
    """Deterministic synthetic parameters, PyTorch-equivalent shapes."""
    keys = jax.random.split(key, 1 + 4 * n_layers)
    params = {"embedding": jax.random.normal(keys[0], (input_dim, emb_dim),
                                             jnp.float32) * 0.1}
    layers = []
    for l in range(n_layers):
        in_dim = emb_dim if l == 0 else hid_dim
        k = keys[1 + 4 * l: 1 + 4 * (l + 1)]
        scale = 1.0 / jnp.sqrt(jnp.float32(hid_dim))
        w_ih = jax.random.uniform(k[0], (4 * hid_dim, in_dim), jnp.float32,
                                  -scale, scale)
        w_hh = jax.random.uniform(k[1], (4 * hid_dim, hid_dim), jnp.float32,
                                  -scale, scale)
        b_ih = jax.random.uniform(k[2], (4 * hid_dim,), jnp.float32, -scale, scale)
        b_hh = jax.random.uniform(k[3], (4 * hid_dim,), jnp.float32, -scale, scale)
        layers.append({
            "w_ih": jnp.transpose(w_ih),                   # (in_dim, 4H)
            "w_hh": jnp.transpose(w_hh),                   # (H, 4H)
            "b": (b_ih + b_hh).reshape(1, 4 * hid_dim),    # (1, 4H)
        })
    params["layers"] = layers
    return params


def encoder_forward(params, src):
    """src: (S, B) int32 -> (hidden, cell) each (n_layers, B, H)."""
    embedded = jnp.take(params["embedding"], src, axis=0)   # (S, B, E)  [JAX glue]
    # dropout: identity (eval mode)
    S, B, E = embedded.shape
    H = params["layers"][0]["w_hh"].shape[0]
    x_flat = embedded.reshape(S * B, E)
    hidden, cell = encoder_lstm(x_flat, params["layers"], S, B, H)
    return hidden, cell


def encoder_forward_ref(params, src):
    """Pure-JAX reference (lax.scan LSTM) for correctness checking."""
    x = jnp.take(params["embedding"], src, axis=0)
    h_list, c_list = [], []
    for layer in params["layers"]:
        w_ih, w_hh, b = layer["w_ih"], layer["w_hh"], layer["b"]
        H = w_hh.shape[0]
        B = x.shape[1]

        def step(carry, x_t):
            h, c = carry
            gates = x_t @ w_ih + h @ w_hh + b
            i = jax.nn.sigmoid(gates[:, 0 * H:1 * H])
            f = jax.nn.sigmoid(gates[:, 1 * H:2 * H])
            g = jnp.tanh(gates[:, 2 * H:3 * H])
            o = jax.nn.sigmoid(gates[:, 3 * H:4 * H])
            c_new = f * c + i * g
            h_new = o * jnp.tanh(c_new)
            return (h_new, c_new), h_new

        init = (jnp.zeros((B, H), jnp.float32), jnp.zeros((B, H), jnp.float32))
        (h_n, c_n), outs = jax.lax.scan(step, init, x)
        h_list.append(h_n)
        c_list.append(c_n)
        x = outs
    return jnp.stack(h_list, 0), jnp.stack(c_list, 0)


if __name__ == "__main__":
    # Small, module-consistent shapes (B=8 keeps sublanes fully used; 4H=128 lanes).
    INPUT_DIM, EMB_DIM, HID_DIM, N_LAYERS = 14, 16, 32, 2
    SEQ_LEN, BATCH = 8, 8

    key = jax.random.PRNGKey(0)
    pkey, skey = jax.random.split(key)
    params = make_encoder_params(pkey, INPUT_DIM, EMB_DIM, HID_DIM, N_LAYERS)
    src = jax.random.randint(skey, (SEQ_LEN, BATCH), 0, INPUT_DIM, jnp.int32)

    hidden, cell = jax.jit(encoder_forward)(params, src)
    hidden, cell = jax.block_until_ready((hidden, cell))

    assert hidden.shape == (N_LAYERS, BATCH, HID_DIM)
    assert cell.shape == (N_LAYERS, BATCH, HID_DIM)

    h_ref, c_ref = encoder_forward_ref(params, src)
    assert jnp.allclose(hidden, h_ref, rtol=1e-4, atol=1e-4)
    assert jnp.allclose(cell, c_ref, rtol=1e-4, atol=1e-4)

    print("KERNEL_OK")
</pallas_src>

<mosaic_0001>
module attributes {stable_mosaic.version = 11 : i64} {
  func.func @kernel(%arg0: memref<64x16xf32, #tpu.memory_space<vmem>>, %arg1: memref<16x128xf32, #tpu.memory_space<vmem>>, %arg2: memref<32x128xf32, #tpu.memory_space<vmem>>, %arg3: memref<1x128xf32, #tpu.memory_space<vmem>>, %arg4: memref<32x128xf32, #tpu.memory_space<vmem>>, %arg5: memref<32x128xf32, #tpu.memory_space<vmem>>, %arg6: memref<1x128xf32, #tpu.memory_space<vmem>>, %arg7: memref<2x8x32xf32, #tpu.memory_space<vmem>>, %arg8: memref<2x8x32xf32, #tpu.memory_space<vmem>>, %arg9: memref<64x32xf32, #tpu.memory_space<vmem>>) attributes {dimension_semantics = [], scalar_prefetch = 0 : i64, scratch_operands = 1 : i64, tpu.core_type = #tpu.core_type<tc>} {
    %c0 = arith.constant 0 : index
    %c0_0 = arith.constant 0 : index
    %0 = vector.load %arg1[%c0, %c0_0] : memref<16x128xf32, #tpu.memory_space<vmem>>, vector<16x128xf32>
    %c0_1 = arith.constant 0 : index
    %c0_2 = arith.constant 0 : index
    %1 = vector.load %arg2[%c0_1, %c0_2] : memref<32x128xf32, #tpu.memory_space<vmem>>, vector<32x128xf32>
    %c0_3 = arith.constant 0 : index
    %c0_4 = arith.constant 0 : index
    %2 = vector.load %arg3[%c0_3, %c0_4] : memref<1x128xf32, #tpu.memory_space<vmem>>, vector<1x128xf32>
    %c0_5 = arith.constant 0 : index
    %c0_6 = arith.constant 0 : index
    %3 = vector.load %arg0[%c0_5, %c0_6] : memref<64x16xf32, #tpu.memory_space<vmem>>, vector<64x16xf32>
    %cst = arith.constant dense<0.000000e+00> : vector<64x128xf32>
    %4 = tpu.matmul %3, %0, %cst {dimension_numbers = #tpu.dot_dimension_numbers<[1], [0], [0], [1], [0, 0, 1, 1], [], []>} : vector<64x16xf32>, vector<16x128xf32>, vector<64x128xf32> -> vector<64x128xf32>
    %5 = vector.broadcast %2 : vector<1x128xf32> to vector<64x128xf32>
    %6 = arith.addf %4, %5 : vector<64x128xf32>
    %cst_7 = arith.constant 0.000000e+00 : f32
    %7 = vector.broadcast %cst_7 : f32 to vector<8x32xf32>
    %cst_8 = arith.constant 0.000000e+00 : f32
    %8 = vector.broadcast %cst_8 : f32 to vector<8x32xf32>
    %9 = vector.extract_strided_slice %6 {offsets = [0, 0], sizes = [8, 128], strides = [1, 1]} : vector<64x128xf32> to vector<8x128xf32>
    %cst_9 = arith.constant dense<0.000000e+00> : vector<8x128xf32>
    %10 = tpu.matmul %7, %1, %cst_9 {dimension_numbers = #tpu.dot_dimension_numbers<[1], [0], [0], [1], [0, 0, 1, 1], [], []>} : vector<8x32xf32>, vector<32x128xf32>, vector<8x128xf32> -> vector<8x128xf32>
    %11 = arith.addf %9, %10 : vector<8x128xf32>
    %12 = arith.negf %11 : vector<8x128xf32>
    %13 = math.exp %12 : vector<8x128xf32>
    %cst_10 = arith.constant 1.000000e+00 : f32
    %14 = vector.broadcast %cst_10 : f32 to vector<8x128xf32>
    %15 = arith.addf %14, %13 : vector<8x128xf32>
    %16 = arith.divf %14, %15 : vector<8x128xf32>
    %17 = math.tanh %11 : vector<8x128xf32>
    %18 = vector.extract_strided_slice %16 {offsets = [0, 0], sizes = [8, 32], strides = [1, 1]} : vector<8x128xf32> to vector<8x32xf32>
    %19 = vector.extract_strided_slice %16 {offsets = [0, 32], sizes = [8, 32], strides = [1, 1]} : vector<8x128xf32> to vector<8x32xf32>
    %20 = vector.extract_strided_slice %17 {offsets = [0, 64], sizes = [8, 32], strides = [1, 1]} : vector<8x128xf32> to vector<8x32xf32>
    %21 = vector.extract_strided_slice %16 {offsets = [0, 96], sizes = [8, 32], strides = [1, 1]} : vector<8x128xf32> to vector<8x32xf32>
    %22 = arith.mulf %19, %8 : vector<8x32xf32>
    %23 = arith.mulf %18, %20 : vector<8x32xf32>
    %24 = arith.addf %22, %23 : vector<8x32xf32>
    %25 = math.tanh %24 : vector<8x32xf32>
    %26 = arith.mulf %21, %25 : vector<8x32xf32>
    %c0_11 = arith.constant 0 : index
    %c0_12 = arith.constant 0 : index
    %27 = vector.load %arg9[%c0_11, %c0_12] : memref<64x32xf32, #tpu.memory_space<vmem>>, vector<8x32xf32>
    tpu.vector_store %arg9[%c0_11, %c0_12], %26 {strides = array<i32>} : memref<64x32xf32, #tpu.memory_space<vmem>>, vector<8x32xf32>,
    %28 = vector.extract_strided_slice %6 {offsets = [8, 0], sizes = [8, 128], strides = [1, 1]} : vector<64x128xf32> to vector<8x128xf32>
    %cst_13 = arith.constant dense<0.000000e+00> : vector<8x128xf32>
    %29 = tpu.matmul %26, %1, %cst_13 {dimension_numbers = #tpu.dot_dimension_numbers<[1], [0], [0], [1], [0, 0, 1, 1], [], []>} : vector<8x32xf32>, vector<32x128xf32>, vector<8x128xf32> -> vector<8x128xf32>
    %30 = arith.addf %28, %29 : vector<8x128xf32>
    %31 = arith.negf %30 : vector<8x128xf32>
    %32 = math.exp %31 : vector<8x128xf32>
    %cst_14 = arith.constant 1.000000e+00 : f32
    %33 = vector.broadcast %cst_14 : f32 to vector<8x128xf32>
    %34 = arith.addf %33, %32 : vector<8x128xf32>
    %35 = arith.divf %33, %34 : vector<8x128xf32>
    %36 = math.tanh %30 : vector<8x128xf32>
    %37 = vector.extract_strided_slice %35 {offsets = [0, 0], sizes = [8, 32], strides = [1, 1]} : vector<8x128xf32> to vector<8x32xf32>
    %38 = vector.extract_strided_slice %35 {offsets = [0, 32], sizes = [8, 32], strides = [1, 1]} : vector<8x128xf32> to vector<8x32xf32>
    %39 = vector.extract_strided_slice %36 {offsets = [0, 64], sizes = [8, 32], strides = [1, 1]} : vector<8x128xf32> to vector<8x32xf32>
    %40 = vector.extract_strided_slice %35 {offsets = [0, 96], sizes = [8, 32], strides = [1, 1]} : vector<8x128xf32> to vector<8x32xf32>
    %41 = arith.mulf %38, %24 : vector<8x32xf32>
    %42 = arith.mulf %37, %39 : vector<8x32xf32>
    %43 = arith.addf %41, %42 : vector<8x32xf32>
    %44 = math.tanh %43 : vector<8x32xf32>
    %45 = arith.mulf %40, %44 : vector<8x32xf32>
    %c8 = arith.constant 8 : index
    %c0_15 = arith.constant 0 : index
    %46 = vector.load %arg9[%c8, %c0_15] : memref<64x32xf32, #tpu.memory_space<vmem>>, vector<8x32xf32>
    tpu.vector_store %arg9[%c8, %c0_15], %45 {strides = array<i32>} : memref<64x32xf32, #tpu.memory_space<vmem>>, vector<8x32xf32>,
    %47 = vector.extract_strided_slice %6 {offsets = [16, 0], sizes = [8, 128], strides = [1, 1]} : vector<64x128xf32> to vector<8x128xf32>
    %cst_16 = arith.constant dense<0.000000e+00> : vector<8x128xf32>
    %48 = tpu.matmul %45, %1, %cst_16 {dimension_numbers = #tpu.dot_dimension_numbers<[1], [0], [0], [1], [0, 0, 1, 1], [], []>} : vector<8x32xf32>, vector<32x128xf32>, vector<8x128xf32> -> vector<8x128xf32>
    %49 = arith.addf %47, %48 : vector<8x128xf32>
    %50 = arith.negf %49 : vector<8x128xf32>
    %51 = math.exp %50 : vector<8x128xf32>
    %cst_17 = arith.constant 1.000000e+00 : f32
    %52 = vector.broadcast %cst_17 : f32 to vector<8x128xf32>
    %53 = arith.addf %52, %51 : vector<8x128xf32>
    %54 = arith.divf %52, %53 : vector<8x128xf32>
    %55 = math.tanh %49 : vector<8x128xf32>
    %56 = vector.extract_strided_slice %54 {offsets = [0, 0], sizes = [8, 32], strides = [1, 1]} : vector<8x128xf32> to vector<8x32xf32>
    %57 = vector.extract_strided_slice %54 {offsets = [0, 32], sizes = [8, 32], strides = [1, 1]} : vector<8x128xf32> to vector<8x32xf32>
    %58 = vector.extract_strided_slice %55 {offsets = [0, 64], sizes = [8, 32], strides = [1, 1]} : vector<8x128xf32> to vector<8x32xf32>
    %59 = vector.extract_strided_slice %54 {offsets = [0, 96], sizes = [8, 32], strides = [1, 1]} : vector<8x128xf32> to vector<8x32xf32>
    %60 = arith.mulf %57, %43 : vector<8x32xf32>
    %61 = arith.mulf %56, %58 : vector<8x32xf32>
    %62 = arith.addf %60, %61 : vector<8x32xf32>
    %63 = math.tanh %62 : vector<8x32xf32>
    %64 = arith.mulf %59, %63 : vector<8x32xf32>
    %c16 = arith.constant 16 : index
    %c0_18 = arith.constant 0 : index
    %65 = vector.load %arg9[%c16, %c0_18] : memref<64x32xf32, #tpu.memory_space<vmem>>, vector<8x32xf32>
    tpu.vector_store %arg9[%c16, %c0_18], %64 {strides = array<i32>} : memref<64x32xf32, #tpu.memory_space<vmem>>, vector<8x32xf32>,
    %66 = vector.extract_strided_slice %6 {offsets = [24, 0], sizes = [8, 128], strides = [1, 1]} : vector<64x128xf32> to vector<8x128xf32>
    %cst_19 = arith.constant dense<0.000000e+00> : vector<8x128xf32>
    %67 = tpu.matmul %64, %1, %cst_19 {dimension_numbers = #tpu.dot_dimension_numbers<[1], [0], [0], [1], [0, 0, 1, 1], [], []>} : vector<8x32xf32>, vector<32x128xf32>, vector<8x128xf32> -> vector<8x128xf32>
    %68 = arith.addf %66, %67 : vector<8x128xf32>
    %69 = arith.negf %68 : vector<8x128xf32>
    %70 = math.exp %69 : vector<8x128xf32>
    %cst_20 = arith.constant 1.000000e+00 : f32
    %71 = vector.broadcast %cst_20 : f32 to vector<8x128xf32>
    %72 = arith.addf %71, %70 : vector<8x128xf32>
    %73 = arith.divf %71, %72 : vector<8x128xf32>
    %74 = math.tanh %68 : vector<8x128xf32>
    %75 = vector.extract_strided_slice %73 {offsets = [0, 0], sizes = [8, 32], strides = [1, 1]} : vector<8x128xf32> to vector<8x32xf32>
    %76 = vector.extract_strided_slice %73 {offsets = [0, 32], sizes = [8, 32], strides = [1, 1]} : vector<8x128xf32> to vector<8x32xf32>
    %77 = vector.extract_strided_slice %74 {offsets = [0, 64], sizes = [8, 32], strides = [1, 1]} : vector<8x128xf32> to vector<8x32xf32>
    %78 = vector.extract_strided_slice %73 {offsets = [0, 96], sizes = [8, 32], strides = [1, 1]} : vector<8x128xf32> to vector<8x32xf32>
    %79 = arith.mulf %76, %62 : vector<8x32xf32>
    %80 = arith.mulf %75, %77 : vector<8x32xf32>
    %81 = arith.addf %79, %80 : vector<8x32xf32>
    %82 = math.tanh %81 : vector<8x32xf32>
    %83 = arith.mulf %78, %82 : vector<8x32xf32>
    %c24 = arith.constant 24 : index
    %c0_21 = arith.constant 0 : index
    %84 = vector.load %arg9[%c24, %c0_21] : memref<64x32xf32, #tpu.memory_space<vmem>>, vector<8x32xf32>
    tpu.vector_store %arg9[%c24, %c0_21], %83 {strides = array<i32>} : memref<64x32xf32, #tpu.memory_space<vmem>>, vector<8x32xf32>,
    %85 = vector.extract_strided_slice %6 {offsets = [32, 0], sizes = [8, 128], strides = [1, 1]} : vector<64x128xf32> to vector<8x128xf32>
    %cst_22 = arith.constant dense<0.000000e+00> : vector<8x128xf32>
    %86 = tpu.matmul %83, %1, %cst_22 {dimension_numbers = #tpu.dot_dimension_numbers<[1], [0], [0], [1], [0, 0, 1, 1], [], []>} : vector<8x32xf32>, vector<32x128xf32>, vector<8x128xf32> -> vector<8x128xf32>
    %87 = arith.addf %85, %86 : vector<8x128xf32>
    %88 = arith.negf %87 : vector<8x128xf32>
    %89 = math.exp %88 : vector<8x128xf32>
    %cst_23 = arith.constant 1.000000e+00 : f32
    %90 = vector.broadcast %cst_23 : f32 to vector<8x128xf32>
    %91 = arith.addf %90, %89 : vector<8x128xf32>
    %92 = arith.divf %90, %91 : vector<8x128xf32>
    %93 = math.tanh %87 : vector<8x128xf32>
    %94 = vector.extract_strided_slice %92 {offsets = [0, 0], sizes = [8, 32], strides = [1, 1]} : vector<8x128xf32> to vector<8x32xf32>
    %95 = vector.extract_strided_slice %92 {offsets = [0, 32], sizes = [8, 32], strides = [1, 1]} : vector<8x128xf32> to vector<8x32xf32>
    %96 = vector.extract_strided_slice %93 {offsets = [0, 64], sizes = [8, 32], strides = [1, 1]} : vector<8x128xf32> to vector<8x32xf32>
    %97 = vector.extract_strided_slice %92 {offsets = [0, 96], sizes = [8, 32], strides = [1, 1]} : vector<8x128xf32> to vector<8x32xf32>
    %98 = arith.mulf %95, %81 : vector<8x32xf32>
    %99 = arith.mulf %94, %96 : vector<8x32xf32>
    %100 = arith.addf %98, %99 : vector<8x32xf32>
    %101 = math.tanh %100 : vector<8x32xf32>
    %102 = arith.mulf %97, %101 : vector<8x32xf32>
    %c32 = arith.constant 32 : index
    %c0_24 = arith.constant 0 : index
    %103 = vector.load %arg9[%c32, %c0_24] : memref<64x32xf32, #tpu.memory_space<vmem>>, vector<8x32xf32>
    tpu.vector_store %arg9[%c32, %c0_24], %102 {strides = array<i32>} : memref<64x32xf32, #tpu.memory_space<vmem>>, vector<8x32xf32>,
    %104 = vector.extract_strided_slice %6 {offsets = [40, 0], sizes = [8, 128], strides = [1, 1]} : vector<64x128xf32> to vector<8x128xf32>
    %cst_25 = arith.constant dense<0.000000e+00> : vector<8x128xf32>
    %105 = tpu.matmul %102, %1, %cst_25 {dimension_numbers = #tpu.dot_dimension_numbers<[1], [0], [0], [1], [0, 0, 1, 1], [], []>} : vector<8x32xf32>, vector<32x128xf32>, vector<8x128xf32> -> vector<8x128xf32>
    %106 = arith.addf %104, %105 : vector<8x128xf32>
    %107 = arith.negf %106 : vector<8x128xf32>
    %108 = math.exp %107 : vector<8x128xf32>
    %cst_26 = arith.constant 1.000000e+00 : f32
    %109 = vector.broadcast %cst_26 : f32 to vector<8x128xf32>
    %110 = arith.addf %109, %108 : vector<8x128xf32>
    %111 = arith.divf %109, %110 : vector<8x128xf32>
    %112 = math.tanh %106 : vector<8x128xf32>
    %113 = vector.extract_strided_slice %111 {offsets = [0, 0], sizes = [8, 32], strides = [1, 1]} : vector<8x128xf32> to vector<8x32xf32>
    %114 = vector.extract_strided_slice %111 {offsets = [0, 32], sizes = [8, 32], strides = [1, 1]} : vector<8x128xf32> to vector<8x32xf32>
    %115 = vector.extract_strided_slice %112 {offsets = [0, 64], sizes = [8, 32], strides = [1, 1]} : vector<8x128xf32> to vector<8x32xf32>
    %116 = vector.extract_strided_slice %111 {offsets = [0, 96], sizes = [8, 32], strides = [1, 1]} : vector<8x128xf32> to vector<8x32xf32>
    %117 = arith.mulf %114, %100 : vector<8x32xf32>
    %118 = arith.mulf %113, %115 : vector<8x32xf32>
    %119 = arith.addf %117, %118 : vector<8x32xf32>
    %120 = math.tanh %119 : vector<8x32xf32>
    %121 = arith.mulf %116, %120 : vector<8x32xf32>
    %c40 = arith.constant 40 : index
    %c0_27 = arith.constant 0 : index
    %122 = vector.load %arg9[%c40, %c0_27] : memref<64x32xf32, #tpu.memory_space<vmem>>, vector<8x32xf32>
    tpu.vector_store %arg9[%c40, %c0_27], %121 {strides = array<i32>} : memref<64x32xf32, #tpu.memory_space<vmem>>, vector<8x32xf32>,
    %123 = vector.extract_strided_slice %6 {offsets = [48, 0], sizes = [8, 128], strides = [1, 1]} : vector<64x128xf32> to vector<8x128xf32>
    %cst_28 = arith.constant dense<0.000000e+00> : vector<8x128xf32>
    %124 = tpu.matmul %121, %1, %cst_28 {dimension_numbers = #tpu.dot_dimension_numbers<[1], [0], [0], [1], [0, 0, 1, 1], [], []>} : vector<8x32xf32>, vector<32x128xf32>, vector<8x128xf32> -> vector<8x128xf32>
    %125 = arith.addf %123, %124 : vector<8x128xf32>
    %126 = arith.negf %125 : vector<8x128xf32>
    %127 = math.exp %126 : vector<8x128xf32>
    %cst_29 = arith.constant 1.000000e+00 : f32
    %128 = vector.broadcast %cst_29 : f32 to vector<8x128xf32>
    %129 = arith.addf %128, %127 : vector<8x128xf32>
    %130 = arith.divf %128, %129 : vector<8x128xf32>
    %131 = math.tanh %125 : vector<8x128xf32>
    %132 = vector.extract_strided_slice %130 {offsets = [0, 0], sizes = [8, 32], strides = [1, 1]} : vector<8x128xf32> to vector<8x32xf32>
    %133 = vector.extract_strided_slice %130 {offsets = [0, 32], sizes = [8, 32], strides = [1, 1]} : vector<8x128xf32> to vector<8x32xf32>
    %134 = vector.extract_strided_slice %131 {offsets = [0, 64], sizes = [8, 32], strides = [1, 1]} : vector<8x128xf32> to vector<8x32xf32>
    %135 = vector.extract_strided_slice %130 {offsets = [0, 96], sizes = [8, 32], strides = [1, 1]} : vector<8x128xf32> to vector<8x32xf32>
    %136 = arith.mulf %133, %119 : vector<8x32xf32>
    %137 = arith.mulf %132, %134 : vector<8x32xf32>
    %138 = arith.addf %136, %137 : vector<8x32xf32>
    %139 = math.tanh %138 : vector<8x32xf32>
    %140 = arith.mulf %135, %139 : vector<8x32xf32>
    %c48 = arith.constant 48 : index
    %c0_30 = arith.constant 0 : index
    %141 = vector.load %arg9[%c48, %c0_30] : memref<64x32xf32, #tpu.memory_space<vmem>>, vector<8x32xf32>
    tpu.vector_store %arg9[%c48, %c0_30], %140 {strides = array<i32>} : memref<64x32xf32, #tpu.memory_space<vmem>>, vector<8x32xf32>,
    %142 = vector.extract_strided_slice %6 {offsets = [56, 0], sizes = [8, 128], strides = [1, 1]} : vector<64x128xf32> to vector<8x128xf32>
    %cst_31 = arith.constant dense<0.000000e+00> : vector<8x128xf32>
    %143 = tpu.matmul %140, %1, %cst_31 {dimension_numbers = #tpu.dot_dimension_numbers<[1], [0], [0], [1], [0, 0, 1, 1], [], []>} : vector<8x32xf32>, vector<32x128xf32>, vector<8x128xf32> -> vector<8x128xf32>
    %144 = arith.addf %142, %143 : vector<8x128xf32>
    %145 = arith.negf %144 : vector<8x128xf32>
    %146 = math.exp %145 : vector<8x128xf32>
    %cst_32 = arith.constant 1.000000e+00 : f32
    %147 = vector.broadcast %cst_32 : f32 to vector<8x128xf32>
    %148 = arith.addf %147, %146 : vector<8x128xf32>
    %149 = arith.divf %147, %148 : vector<8x128xf32>
    %150 = math.tanh %144 : vector<8x128xf32>
    %151 = vector.extract_strided_slice %149 {offsets = [0, 0], sizes = [8, 32], strides = [1, 1]} : vector<8x128xf32> to vector<8x32xf32>
    %152 = vector.extract_strided_slice %149 {offsets = [0, 32], sizes = [8, 32], strides = [1, 1]} : vector<8x128xf32> to vector<8x32xf32>
    %153 = vector.extract_strided_slice %150 {offsets = [0, 64], sizes = [8, 32], strides = [1, 1]} : vector<8x128xf32> to vector<8x32xf32>
    %154 = vector.extract_strided_slice %149 {offsets = [0, 96], sizes = [8, 32], strides = [1, 1]} : vector<8x128xf32> to vector<8x32xf32>
    %155 = arith.mulf %152, %138 : vector<8x32xf32>
    %156 = arith.mulf %151, %153 : vector<8x32xf32>
    %157 = arith.addf %155, %156 : vector<8x32xf32>
    %158 = math.tanh %157 : vector<8x32xf32>
    %159 = arith.mulf %154, %158 : vector<8x32xf32>
    %c56 = arith.constant 56 : index
    %c0_33 = arith.constant 0 : index
    %160 = vector.load %arg9[%c56, %c0_33] : memref<64x32xf32, #tpu.memory_space<vmem>>, vector<8x32xf32>
    tpu.vector_store %arg9[%c56, %c0_33], %159 {strides = array<i32>} : memref<64x32xf32, #tpu.memory_space<vmem>>, vector<8x32xf32>,
    %c0_34 = arith.constant 0 : index
    %c0_35 = arith.constant 0 : index
    %c0_36 = arith.constant 0 : index
    %161 = vector.load %arg7[%c0_34, %c0_35, %c0_36] : memref<2x8x32xf32, #tpu.memory_space<vmem>>, vector<1x8x32xf32>
    %162 = vector.shape_cast %161 : vector<1x8x32xf32> to vector<8x32xf32>
    %163 = vector.shape_cast %159 : vector<8x32xf32> to vector<1x8x32xf32>
    tpu.vector_store %arg7[%c0_34, %c0_35, %c0_36], %163 {strides = array<i32>} : memref<2x8x32xf32, #tpu.memory_space<vmem>>, vector<1x8x32xf32>,
    %c0_37 = arith.constant 0 : index
    %c0_38 = arith.constant 0 : index
    %c0_39 = arith.constant 0 : index
    %164 = vector.load %arg8[%c0_37, %c0_38, %c0_39] : memref<2x8x32xf32, #tpu.memory_space<vmem>>, vector<1x8x32xf32>
    %165 = vector.shape_cast %164 : vector<1x8x32xf32> to vector<8x32xf32>
    %166 = vector.shape_cast %157 : vector<8x32xf32> to vector<1x8x32xf32>
    tpu.vector_store %arg8[%c0_37, %c0_38, %c0_39], %166 {strides = array<i32>} : memref<2x8x32xf32, #tpu.memory_space<vmem>>, vector<1x8x32xf32>,
    %c0_40 = arith.constant 0 : index
    %c0_41 = arith.constant 0 : index
    %167 = vector.load %arg4[%c0_40, %c0_41] : memref<32x128xf32, #tpu.memory_space<vmem>>, vector<32x128xf32>
    %c0_42 = arith.constant 0 : index
    %c0_43 = arith.constant 0 : index
    %168 = vector.load %arg5[%c0_42, %c0_43] : memref<32x128xf32, #tpu.memory_space<vmem>>, vector<32x128xf32>
    %c0_44 = arith.constant 0 : index
    %c0_45 = arith.constant 0 : index
    %169 = vector.load %arg6[%c0_44, %c0_45] : memref<1x128xf32, #tpu.memory_space<vmem>>, vector<1x128xf32>
    %c0_46 = arith.constant 0 : index
    %c0_47 = arith.constant 0 : index
    %170 = vector.load %arg9[%c0_46, %c0_47] : memref<64x32xf32, #tpu.memory_space<vmem>>, vector<64x32xf32>
    %cst_48 = arith.constant dense<0.000000e+00> : vector<64x128xf32>
    %171 = tpu.matmul %170, %167, %cst_48 {dimension_numbers = #tpu.dot_dimension_numbers<[1], [0], [0], [1], [0, 0, 1, 1], [], []>} : vector<64x32xf32>, vector<32x128xf32>, vector<64x128xf32> -> vector<64x128xf32>
    %172 = vector.broadcast %169 : vector<1x128xf32> to vector<64x128xf32>
    %173 = arith.addf %171, %172 : vector<64x128xf32>
    %cst_49 = arith.constant 0.000000e+00 : f32
    %174 = vector.broadcast %cst_49 : f32 to vector<8x32xf32>
    %cst_50 = arith.constant 0.000000e+00 : f32
    %175 = vector.broadcast %cst_50 : f32 to vector<8x32xf32>
    %176 = vector.extract_strided_slice %173 {offsets = [0, 0], sizes = [8, 128], strides = [1, 1]} : vector<64x128xf32> to vector<8x128xf32>
    %cst_51 = arith.constant dense<0.000000e+00> : vector<8x128xf32>
    %177 = tpu.matmul %174, %168, %cst_51 {dimension_numbers = #tpu.dot_dimension_numbers<[1], [0], [0], [1], [0, 0, 1, 1], [], []>} : vector<8x32xf32>, vector<32x128xf32>, vector<8x128xf32> -> vector<8x128xf32>
    %178 = arith.addf %176, %177 : vector<8x128xf32>
    %179 = arith.negf %178 : vector<8x128xf32>
    %180 = math.exp %179 : vector<8x128xf32>
    %cst_52 = arith.constant 1.000000e+00 : f32
    %181 = vector.broadcast %cst_52 : f32 to vector<8x128xf32>
    %182 = arith.addf %181, %180 : vector<8x128xf32>
    %183 = arith.divf %181, %182 : vector<8x128xf32>
    %184 = math.tanh %178 : vector<8x128xf32>
    %185 = vector.extract_strided_slice %183 {offsets = [0, 0], sizes = [8, 32], strides = [1, 1]} : vector<8x128xf32> to vector<8x32xf32>
    %186 = vector.extract_strided_slice %183 {offsets = [0, 32], sizes = [8, 32], strides = [1, 1]} : vector<8x128xf32> to vector<8x32xf32>
    %187 = vector.extract_strided_slice %184 {offsets = [0, 64], sizes = [8, 32], strides = [1, 1]} : vector<8x128xf32> to vector<8x32xf32>
    %188 = vector.extract_strided_slice %183 {offsets = [0, 96], sizes = [8, 32], strides = [1, 1]} : vector<8x128xf32> to vector<8x32xf32>
    %189 = arith.mulf %186, %175 : vector<8x32xf32>
    %190 = arith.mulf %185, %187 : vector<8x32xf32>
    %191 = arith.addf %189, %190 : vector<8x32xf32>
    %192 = math.tanh %191 : vector<8x32xf32>
    %193 = arith.mulf %188, %192 : vector<8x32xf32>
    %194 = vector.extract_strided_slice %173 {offsets = [8, 0], sizes = [8, 128], strides = [1, 1]} : vector<64x128xf32> to vector<8x128xf32>
    %cst_53 = arith.constant dense<0.000000e+00> : vector<8x128xf32>
    %195 = tpu.matmul %193, %168, %cst_53 {dimension_numbers = #tpu.dot_dimension_numbers<[1], [0], [0], [1], [0, 0, 1, 1], [], []>} : vector<8x32xf32>, vector<32x128xf32>, vector<8x128xf32> -> vector<8x128xf32>
    %196 = arith.addf %194, %195 : vector<8x128xf32>
    %197 = arith.negf %196 : vector<8x128xf32>
    %198 = math.exp %197 : vector<8x128xf32>
    %cst_54 = arith.constant 1.000000e+00 : f32
    %199 = vector.broadcast %cst_54 : f32 to vector<8x128xf32>
    %200 = arith.addf %199, %198 : vector<8x128xf32>
    %201 = arith.divf %199, %200 : vector<8x128xf32>
    %202 = math.tanh %196 : vector<8x128xf32>
    %203 = vector.extract_strided_slice %201 {offsets = [0, 0], sizes = [8, 32], strides = [1, 1]} : vector<8x128xf32> to vector<8x32xf32>
    %204 = vector.extract_strided_slice %201 {offsets = [0, 32], sizes = [8, 32], strides = [1, 1]} : vector<8x128xf32> to vector<8x32xf32>
    %205 = vector.extract_strided_slice %202 {offsets = [0, 64], sizes = [8, 32], strides = [1, 1]} : vector<8x128xf32> to vector<8x32xf32>
    %206 = vector.extract_strided_slice %201 {offsets = [0, 96], sizes = [8, 32], strides = [1, 1]} : vector<8x128xf32> to vector<8x32xf32>
    %207 = arith.mulf %204, %191 : vector<8x32xf32>
    %208 = arith.mulf %203, %205 : vector<8x32xf32>
    %209 = arith.addf %207, %208 : vector<8x32xf32>
    %210 = math.tanh %209 : vector<8x32xf32>
    %211 = arith.mulf %206, %210 : vector<8x32xf32>
    %212 = vector.extract_strided_slice %173 {offsets = [16, 0], sizes = [8, 128], strides = [1, 1]} : vector<64x128xf32> to vector<8x128xf32>
    %cst_55 = arith.constant dense<0.000000e+00> : vector<8x128xf32>
    %213 = tpu.matmul %211, %168, %cst_55 {dimension_numbers = #tpu.dot_dimension_numbers<[1], [0], [0], [1], [0, 0, 1, 1], [], []>} : vector<8x32xf32>, vector<32x128xf32>, vector<8x128xf32> -> vector<8x128xf32>
    %214 = arith.addf %212, %213 : vector<8x128xf32>
    %215 = arith.negf %214 : vector<8x128xf32>
    %216 = math.exp %215 : vector<8x128xf32>
    %cst_56 = arith.constant 1.000000e+00 : f32
    %217 = vector.broadcast %cst_56 : f32 to vector<8x128xf32>
    %218 = arith.addf %217, %216 : vector<8x128xf32>
    %219 = arith.divf %217, %218 : vector<8x128xf32>
    %220 = math.tanh %214 : vector<8x128xf32>
    %221 = vector.extract_strided_slice %219 {offsets = [0, 0], sizes = [8, 32], strides = [1, 1]} : vector<8x128xf32> to vector<8x32xf32>
    %222 = vector.extract_strided_slice %219 {offsets = [0, 32], sizes = [8, 32], strides = [1, 1]} : vector<8x128xf32> to vector<8x32xf32>
    %223 = vector.extract_strided_slice %220 {offsets = [0, 64], sizes = [8, 32], strides = [1, 1]} : vector<8x128xf32> to vector<8x32xf32>
    %224 = vector.extract_strided_slice %219 {offsets = [0, 96], sizes = [8, 32], strides = [1, 1]} : vector<8x128xf32> to vector<8x32xf32>
    %225 = arith.mulf %222, %209 : vector<8x32xf32>
    %226 = arith.mulf %221, %223 : vector<8x32xf32>
    %227 = arith.addf %225, %226 : vector<8x32xf32>
    %228 = math.tanh %227 : vector<8x32xf32>
    %229 = arith.mulf %224, %228 : vector<8x32xf32>
    %230 = vector.extract_strided_slice %173 {offsets = [24, 0], sizes = [8, 128], strides = [1, 1]} : vector<64x128xf32> to vector<8x128xf32>
    %cst_57 = arith.constant dense<0.000000e+00> : vector<8x128xf32>
    %231 = tpu.matmul %229, %168, %cst_57 {dimension_numbers = #tpu.dot_dimension_numbers<[1], [0], [0], [1], [0, 0, 1, 1], [], []>} : vector<8x32xf32>, vector<32x128xf32>, vector<8x128xf32> -> vector<8x128xf32>
    %232 = arith.addf %230, %231 : vector<8x128xf32>
    %233 = arith.negf %232 : vector<8x128xf32>
    %234 = math.exp %233 : vector<8x128xf32>
    %cst_58 = arith.constant 1.000000e+00 : f32
    %235 = vector.broadcast %cst_58 : f32 to vector<8x128xf32>
    %236 = arith.addf %235, %234 : vector<8x128xf32>
    %237 = arith.divf %235, %236 : vector<8x128xf32>
    %238 = math.tanh %232 : vector<8x128xf32>
    %239 = vector.extract_strided_slice %237 {offsets = [0, 0], sizes = [8, 32], strides = [1, 1]} : vector<8x128xf32> to vector<8x32xf32>
    %240 = vector.extract_strided_slice %237 {offsets = [0, 32], sizes = [8, 32], strides = [1, 1]} : vector<8x128xf32> to vector<8x32xf32>
    %241 = vector.extract_strided_slice %238 {offsets = [0, 64], sizes = [8, 32], strides = [1, 1]} : vector<8x128xf32> to vector<8x32xf32>
    %242 = vector.extract_strided_slice %237 {offsets = [0, 96], sizes = [8, 32], strides = [1, 1]} : vector<8x128xf32> to vector<8x32xf32>
    %243 = arith.mulf %240, %227 : vector<8x32xf32>
    %244 = arith.mulf %239, %241 : vector<8x32xf32>
    %245 = arith.addf %243, %244 : vector<8x32xf32>
    %246 = math.tanh %245 : vector<8x32xf32>
    %247 = arith.mulf %242, %246 : vector<8x32xf32>
    %248 = vector.extract_strided_slice %173 {offsets = [32, 0], sizes = [8, 128], strides = [1, 1]} : vector<64x128xf32> to vector<8x128xf32>
    %cst_59 = arith.constant dense<0.000000e+00> : vector<8x128xf32>
    %249 = tpu.matmul %247, %168, %cst_59 {dimension_numbers = #tpu.dot_dimension_numbers<[1], [0], [0], [1], [0, 0, 1, 1], [], []>} : vector<8x32xf32>, vector<32x128xf32>, vector<8x128xf32> -> vector<8x128xf32>
    %250 = arith.addf %248, %249 : vector<8x128xf32>
    %251 = arith.negf %250 : vector<8x128xf32>
    %252 = math.exp %251 : vector<8x128xf32>
    %cst_60 = arith.constant 1.000000e+00 : f32
    %253 = vector.broadcast %cst_60 : f32 to vector<8x128xf32>
    %254 = arith.addf %253, %252 : vector<8x128xf32>
    %255 = arith.divf %253, %254 : vector<8x128xf32>
    %256 = math.tanh %250 : vector<8x128xf32>
    %257 = vector.extract_strided_slice %255 {offsets = [0, 0], sizes = [8, 32], strides = [1, 1]} : vector<8x128xf32> to vector<8x32xf32>
    %258 = vector.extract_strided_slice %255 {offsets = [0, 32], sizes = [8, 32], strides = [1, 1]} : vector<8x128xf32> to vector<8x32xf32>
    %259 = vector.extract_strided_slice %256 {offsets = [0, 64], sizes = [8, 32], strides = [1, 1]} : vector<8x128xf32> to vector<8x32xf32>
    %260 = vector.extract_strided_slice %255 {offsets = [0, 96], sizes = [8, 32], strides = [1, 1]} : vector<8x128xf32> to vector<8x32xf32>
    %261 = arith.mulf %258, %245 : vector<8x32xf32>
    %262 = arith.mulf %257, %259 : vector<8x32xf32>
    %263 = arith.addf %261, %262 : vector<8x32xf32>
    %264 = math.tanh %263 : vector<8x32xf32>
    %265 = arith.mulf %260, %264 : vector<8x32xf32>
    %266 = vector.extract_strided_slice %173 {offsets = [40, 0], sizes = [8, 128], strides = [1, 1]} : vector<64x128xf32> to vector<8x128xf32>
    %cst_61 = arith.constant dense<0.000000e+00> : vector<8x128xf32>
    %267 = tpu.matmul %265, %168, %cst_61 {dimension_numbers = #tpu.dot_dimension_numbers<[1], [0], [0], [1], [0, 0, 1, 1], [], []>} : vector<8x32xf32>, vector<32x128xf32>, vector<8x128xf32> -> vector<8x128xf32>
    %268 = arith.addf %266, %267 : vector<8x128xf32>
    %269 = arith.negf %268 : vector<8x128xf32>
    %270 = math.exp %269 : vector<8x128xf32>
    %cst_62 = arith.constant 1.000000e+00 : f32
    %271 = vector.broadcast %cst_62 : f32 to vector<8x128xf32>
    %272 = arith.addf %271, %270 : vector<8x128xf32>
    %273 = arith.divf %271, %272 : vector<8x128xf32>
    %274 = math.tanh %268 : vector<8x128xf32>
    %275 = vector.extract_strided_slice %273 {offsets = [0, 0], sizes = [8, 32], strides = [1, 1]} : vector<8x128xf32> to vector<8x32xf32>
    %276 = vector.extract_strided_slice %273 {offsets = [0, 32], sizes = [8, 32], strides = [1, 1]} : vector<8x128xf32> to vector<8x32xf32>
    %277 = vector.extract_strided_slice %274 {offsets = [0, 64], sizes = [8, 32], strides = [1, 1]} : vector<8x128xf32> to vector<8x32xf32>
    %278 = vector.extract_strided_slice %273 {offsets = [0, 96], sizes = [8, 32], strides = [1, 1]} : vector<8x128xf32> to vector<8x32xf32>
    %279 = arith.mulf %276, %263 : vector<8x32xf32>
    %280 = arith.mulf %275, %277 : vector<8x32xf32>
    %281 = arith.addf %279, %280 : vector<8x32xf32>
    %282 = math.tanh %281 : vector<8x32xf32>
    %283 = arith.mulf %278, %282 : vector<8x32xf32>
    %284 = vector.extract_strided_slice %173 {offsets = [48, 0], sizes = [8, 128], strides = [1, 1]} : vector<64x128xf32> to vector<8x128xf32>
    %cst_63 = arith.constant dense<0.000000e+00> : vector<8x128xf32>
    %285 = tpu.matmul %283, %168, %cst_63 {dimension_numbers = #tpu.dot_dimension_numbers<[1], [0], [0], [1], [0, 0, 1, 1], [], []>} : vector<8x32xf32>, vector<32x128xf32>, vector<8x128xf32> -> vector<8x128xf32>
    %286 = arith.addf %284, %285 : vector<8x128xf32>
    %287 = arith.negf %286 : vector<8x128xf32>
    %288 = math.exp %287 : vector<8x128xf32>
    %cst_64 = arith.constant 1.000000e+00 : f32
    %289 = vector.broadcast %cst_64 : f32 to vector<8x128xf32>
    %290 = arith.addf %289, %288 : vector<8x128xf32>
    %291 = arith.divf %289, %290 : vector<8x128xf32>
    %292 = math.tanh %286 : vector<8x128xf32>
    %293 = vector.extract_strided_slice %291 {offsets = [0, 0], sizes = [8, 32], strides = [1, 1]} : vector<8x128xf32> to vector<8x32xf32>
    %294 = vector.extract_strided_slice %291 {offsets = [0, 32], sizes = [8, 32], strides = [1, 1]} : vector<8x128xf32> to vector<8x32xf32>
    %295 = vector.extract_strided_slice %292 {offsets = [0, 64], sizes = [8, 32], strides = [1, 1]} : vector<8x128xf32> to vector<8x32xf32>
    %296 = vector.extract_strided_slice %291 {offsets = [0, 96], sizes = [8, 32], strides = [1, 1]} : vector<8x128xf32> to vector<8x32xf32>
    %297 = arith.mulf %294, %281 : vector<8x32xf32>
    %298 = arith.mulf %293, %295 : vector<8x32xf32>
    %299 = arith.addf %297, %298 : vector<8x32xf32>
    %300 = math.tanh %299 : vector<8x32xf32>
    %301 = arith.mulf %296, %300 : vector<8x32xf32>
    %302 = vector.extract_strided_slice %173 {offsets = [56, 0], sizes = [8, 128], strides = [1, 1]} : vector<64x128xf32> to vector<8x128xf32>
    %cst_65 = arith.constant dense<0.000000e+00> : vector<8x128xf32>
    %303 = tpu.matmul %301, %168, %cst_65 {dimension_numbers = #tpu.dot_dimension_numbers<[1], [0], [0], [1], [0, 0, 1, 1], [], []>} : vector<8x32xf32>, vector<32x128xf32>, vector<8x128xf32> -> vector<8x128xf32>
    %304 = arith.addf %302, %303 : vector<8x128xf32>
    %305 = arith.negf %304 : vector<8x128xf32>
    %306 = math.exp %305 : vector<8x128xf32>
    %cst_66 = arith.constant 1.000000e+00 : f32
    %307 = vector.broadcast %cst_66 : f32 to vector<8x128xf32>
    %308 = arith.addf %307, %306 : vector<8x128xf32>
    %309 = arith.divf %307, %308 : vector<8x128xf32>
    %310 = math.tanh %304 : vector<8x128xf32>
    %311 = vector.extract_strided_slice %309 {offsets = [0, 0], sizes = [8, 32], strides = [1, 1]} : vector<8x128xf32> to vector<8x32xf32>
    %312 = vector.extract_strided_slice %309 {offsets = [0, 32], sizes = [8, 32], strides = [1, 1]} : vector<8x128xf32> to vector<8x32xf32>
    %313 = vector.extract_strided_slice %310 {offsets = [0, 64], sizes = [8, 32], strides = [1, 1]} : vector<8x128xf32> to vector<8x32xf32>
    %314 = vector.extract_strided_slice %309 {offsets = [0, 96], sizes = [8, 32], strides = [1, 1]} : vector<8x128xf32> to vector<8x32xf32>
    %315 = arith.mulf %312, %299 : vector<8x32xf32>
    %316 = arith.mulf %311, %313 : vector<8x32xf32>
    %317 = arith.addf %315, %316 : vector<8x32xf32>
    %318 = math.tanh %317 : vector<8x32xf32>
    %319 = arith.mulf %314, %318 : vector<8x32xf32>
    %c1 = arith.constant 1 : index
    %c0_67 = arith.constant 0 : index
    %c0_68 = arith.constant 0 : index
    %320 = vector.load %arg7[%c1, %c0_67, %c0_68] : memref<2x8x32xf32, #tpu.memory_space<vmem>>, vector<1x8x32xf32>
    %321 = vector.shape_cast %320 : vector<1x8x32xf32> to vector<8x32xf32>
    %322 = vector.shape_cast %319 : vector<8x32xf32> to vector<1x8x32xf32>
    tpu.vector_store %arg7[%c1, %c0_67, %c0_68], %322 {strides = array<i32>} : memref<2x8x32xf32, #tpu.memory_space<vmem>>, vector<1x8x32xf32>,
    %c1_69 = arith.constant 1 : index
    %c0_70 = arith.constant 0 : index
    %c0_71 = arith.constant 0 : index
    %323 = vector.load %arg8[%c1_69, %c0_70, %c0_71] : memref<2x8x32xf32, #tpu.memory_space<vmem>>, vector<1x8x32xf32>
    %324 = vector.shape_cast %323 : vector<1x8x32xf32> to vector<8x32xf32>
    %325 = vector.shape_cast %317 : vector<8x32xf32> to vector<1x8x32xf32>
    tpu.vector_store %arg8[%c1_69, %c0_70, %c0_71], %325 {strides = array<i32>} : memref<2x8x32xf32, #tpu.memory_space<vmem>>, vector<1x8x32xf32>,
    return
  }
}

</mosaic_0001>

<llo_original>
// kernel: encoder_forward.1
$region0: #{encoder_forward.1}
  #allocation0 [shape = 'u32[]', space=smem, size = 0x4, offset = 0x4, fixed_abs, tag = 'smem constant byte address 0x4 - core index']
  #allocation1 [shape = 'u32[144,128]{1,0:T(1,128)}', space=vmem, size = 0x12000, scoped, tag = 'internal scratch']
  #allocation2 [shape = 'f32[64,32]{1,0:T(8,128)}', space=vmem, size = 0x8000, scoped, tag = 'scratch operand']
  %s0 = inlined_call_operand.vmem [shape: f32[64,16], index: 0, kind: input, shape index: {}]
  %s1 = inlined_call_operand.vmem [shape: f32[16,128], index: 1, kind: input, shape index: {}]
  %s2 = inlined_call_operand.vmem [shape: f32[32,128], index: 2, kind: input, shape index: {}]
  %s3 = inlined_call_operand.vmem [shape: f32[1,128], index: 3, kind: input, shape index: {}]
  %s4 = inlined_call_operand.vmem [shape: f32[32,128], index: 4, kind: input, shape index: {}]
  %s5 = inlined_call_operand.vmem [shape: f32[32,128], index: 5, kind: input, shape index: {}]
  %s6 = inlined_call_operand.vmem [shape: f32[1,128], index: 6, kind: input, shape index: {}]
  %s7 = inlined_call_operand.hbm [shape: f32[2,8,32], index: 7, kind: output, shape index: {0}]
  %s8 = inlined_call_operand.hbm [shape: f32[2,8,32], index: 8, kind: output, shape index: {1}]
  %9 = xla_tuple %s7, %s8
  %s10 = sld [smem:[#allocation0]]
  $region46: #{encoder_forward.1} parent=0
    _
  %s12 = ssub.s32 1, %s10
  %s13 = scalar_select 0, %s12, %s10
  $region1: #{encoder_forward.1} parent=0
    #allocation3 [shape = 'u8[8192]{0}', space=vmem, size = 0x2000, scoped, tag = 'output window, operand 0, single buffered']
    #allocation4 [shape = 's32[1]{0}', space=sflag, size = 0x4, scoped, tag = 'scoped memory for encoder_forward.1']
    #allocation5 [shape = 'u8[8192]{0}', space=vmem, size = 0x2000, scoped, tag = 'output window, operand 1, single buffered']
    #allocation6 [shape = 's32[1]{0}', space=sflag, size = 0x4, scoped, tag = 'scoped memory for encoder_forward.1']
    %14 = vsyncpa [#allocation4], 0
    %15 = vsyncpa [#allocation6], 0
    // Predicated region
    $region2: #{encoder_forward.1} parent=1 // pred_check
      _
    $region3: #{encoder_forward.1} parent=1 // pred_check_branch
      %17 = sbr.rel (0) target = $region5
    $region4: #{encoder_forward.1} parent=1 // pred_region
      _
    $region5: #{encoder_forward.1} parent=1 // pred_fallthru
      _
    // Predicated region
    $region6: #{encoder_forward.1} parent=1 // pred_check
      _
    $region7: #{encoder_forward.1} parent=1 // pred_check_branch
      %19 = sbr.rel (0) target = $region9
    $region8: #{encoder_forward.1} parent=1 // pred_region
      _
    $region9: #{encoder_forward.1} parent=1 // pred_fallthru
      _
    // Predicated region
    $region10: #{encoder_forward.1} parent=1 // pred_check
      _
    $region11: #{encoder_forward.1} parent=1 // pred_check_branch
      %21 = sbr.rel (0) target = $region13
    $region12: #{encoder_forward.1} parent=1 // pred_region
      _
    $region13: #{encoder_forward.1} parent=1 // pred_fallthru
      _
    // Predicated region
    $region14: #{encoder_forward.1} parent=1 // pred_check
      _
    $region15: #{encoder_forward.1} parent=1 // pred_check_branch
      %23 = sbr.rel (0) target = $region17
    $region16: #{encoder_forward.1} parent=1 // pred_region
      _
    $region17: #{encoder_forward.1} parent=1 // pred_fallthru
      _
    // Predicated region
    $region18: #{encoder_forward.1} parent=1 // pred_check
      _
    $region19: #{encoder_forward.1} parent=1 // pred_check_branch
      %25 = sbr.rel (0) target = $region21
    $region20: #{encoder_forward.1} parent=1 // pred_region
      _
    $region21: #{encoder_forward.1} parent=1 // pred_fallthru
      _
    // Predicated region
    $region22: #{encoder_forward.1} parent=1 // pred_check
      _
    $region23: #{encoder_forward.1} parent=1 // pred_check_branch
      %27 = sbr.rel (0) target = $region25
    $region24: #{encoder_forward.1} parent=1 // pred_region
      _
    $region25: #{encoder_forward.1} parent=1 // pred_fallthru
      _
    // Predicated region
    $region26: #{encoder_forward.1} parent=1 // pred_check
      _
    $region27: #{encoder_forward.1} parent=1 // pred_check_branch
      %29 = sbr.rel (0) target = $region29
    $region28: #{encoder_forward.1} parent=1 // pred_region
      _
    $region29: #{encoder_forward.1} parent=1 // pred_fallthru
      _
    %v30 = vld [vmem:[%s1] sm:$0xff]
    %v31 = vld [vmem:[%s1 + $0x8] sm:$0xff]
    %v32 = vld [vmem:[%s2] sm:$0xff]
    %v33 = vld [vmem:[%s2 + $0x8] sm:$0xff]
    %v34 = vld [vmem:[%s2 + $0x10] sm:$0xff]
    %v35 = vld [vmem:[%s2 + $0x18] sm:$0xff]
    %v36 = vld [vmem:[%s3] sm:$0x1]
    %v37 = vld [vmem:[%s0] sm:$0xff]
    %v38 = vld [vmem:[%s0 + $0x8] sm:$0xff]
    %v39 = vld [vmem:[%s0 + $0x10] sm:$0xff]
    %v40 = vld [vmem:[%s0 + $0x18] sm:$0xff]
    %v41 = vld [vmem:[%s0 + $0x20] sm:$0xff]
    %v42 = vld [vmem:[%s0 + $0x28] sm:$0xff]
    %v43 = vld [vmem:[%s0 + $0x30] sm:$0xff]
    %v44 = vld [vmem:[%s0 + $0x38] sm:$0xff]
    %v46 = vlaneseq
    %v47 = vshrl.u32 %v46, 7
    %v48 = vsub.s32 0, %v47
    %v49 = vrot.slane %v36, %v48
    %vm51 = vcmask 130048
    %v53 = vsel %vm51, %v37, 0
    %v56 = vsel %vm51, %v38, 0
    %v59 = vsel %vm51, %v39, 0
    %v62 = vsel %vm51, %v40, 0
    %v65 = vsel %vm51, %v41, 0
    %v68 = vsel %vm51, %v42, 0
    %v71 = vsel %vm51, %v43, 0
    %v74 = vsel %vm51, %v44, 0
    %76 = vmatprep.subr.mxu0 0.0
    %77 = vmatpush1.msra.mxu0 %v30
    %78 = vmatprep.subr.mxu0 0.0
    %79 = vmatpush1.msra.mxu0 %v31
    %80 = vmatprep.subr.mxu0 0.0
    %81 = vmatpush1.msra.mxu0 0.0
    %82 = vmatprep.subr.mxu0 0.0
    %83 = vmatpush1.msra.mxu0 0.0
    %84 = vmatprep.subr.mxu0 0.0
    %85 = vmatpush1.msra.mxu0 0.0
    %86 = vmatprep.subr.mxu0 0.0
    %87 = vmatpush1.msra.mxu0 0.0
    %88 = vmatprep.subr.mxu0 0.0
    %89 = vmatpush1.msra.mxu0 0.0
    %90 = vmatprep.subr.mxu0 0.0
    %91 = vmatpush1.msra.mxu0 0.0
    %92 = vmatprep.subr.mxu0 0.0
    %93 = vmatpush1.msra.mxu0 0.0
    %94 = vmatprep.subr.mxu0 0.0
    %95 = vmatpush1.msra.mxu0 0.0
    %96 = vmatprep.subr.mxu0 0.0
    %97 = vmatpush1.msra.mxu0 0.0
    %98 = vmatprep.subr.mxu0 0.0
    %99 = vmatpush1.msra.mxu0 0.0
    %100 = vmatprep.subr.mxu0 0.0
    %101 = vmatpush1.msra.mxu0 0.0
    %102 = vmatprep.subr.mxu0 0.0
    %103 = vmatpush1.msra.mxu0 0.0
    %104 = vmatprep.subr.mxu0 0.0
    %105 = vmatpush1.msra.mxu0 0.0
    %106 = vmatprep.subr.mxu0 0.0
    %107 = vmatpush1.msra.mxu0 0.0
    %108 = vmatprep.subr.mxu0 0.0
    %109 = vmatpush1.msra.mxu0 0.0
    %110 = vmatprep.subr.mxu0 0.0
    %111 = vmatpush1.msra.mxu0 0.0
    %112 = vmatprep.subr.mxu0 0.0
    %113 = vmatpush1.msra.mxu0 0.0
    %114 = vmatprep.subr.mxu0 0.0
    %115 = vmatpush1.msra.mxu0 0.0
    %116 = vmatprep.subr.mxu0 0.0
    %117 = vmatpush1.msra.mxu0 0.0
    %118 = vmatprep.subr.mxu0 0.0
    %119 = vmatpush1.msra.mxu0 0.0
    %120 = vmatprep.subr.mxu0 0.0
    %121 = vmatpush1.msra.mxu0 0.0
    %122 = vmatprep.subr.mxu0 0.0
    %123 = vmatpush1.msra.mxu0 0.0
    %124 = vmatprep.subr.mxu0 0.0
    %125 = vmatpush1.msra.mxu0 0.0
    %126 = vmatprep.subr.mxu0 0.0
    %127 = vmatpush1.msra.mxu0 0.0
    %128 = vmatprep.subr.mxu0 0.0
    %129 = vmatpush1.msra.mxu0 0.0
    %130 = vmatprep.subr.mxu0 0.0
    %131 = vmatpush1.msra.mxu0 0.0
    %132 = vmatprep.subr.mxu0 0.0
    %133 = vmatpush1.msra.mxu0 0.0
    %134 = vmatprep.subr.mxu0 0.0
    %135 = vmatpush1.msra.mxu0 0.0
    %136 = vmatprep.subr.mxu0 0.0
    %137 = vmatpush1.msra.mxu0 0.0
    %138 = vmatprep.subr.mxu0 0.0
    %139 = vmatpush1.msra.mxu0 0.0
    %140 = vmatprep.mubr.f32.mxu0 0.0
    %141 = vmatmul.mubr.f32.gmra.mrb[0].mxu0 %v53
    %v142 = vpop.f32.mrb[0].mxu0
    %v143 = vadd.f32 %v49, %v142
    %v144 = vpop.f32.mrb[0].mxu0
    %145 = vmatprep.mubr.f32.mxu0 0.0
    %146 = vmatmul.mubr.f32.gmra.mrb[0].mxu0 %v56
    %v147 = vpop.f32.mrb[0].mxu0
    %v148 = vadd.f32 %v49, %v147
    %v149 = vpop.f32.mrb[0].mxu0
    %150 = vmatprep.mubr.f32.mxu0 0.0
    %151 = vmatmul.mubr.f32.gmra.mrb[0].mxu0 %v59
    %v152 = vpop.f32.mrb[0].mxu0
    %v153 = vadd.f32 %v49, %v152
    %v154 = vpop.f32.mrb[0].mxu0
    %155 = vmatprep.mubr.f32.mxu0 0.0
    %156 = vmatmul.mubr.f32.gmra.mrb[0].mxu0 %v62
    %v157 = vpop.f32.mrb[0].mxu0
    %v158 = vadd.f32 %v49, %v157
    %v159 = vpop.f32.mrb[0].mxu0
    %160 = vmatprep.mubr.f32.mxu0 0.0
    %161 = vmatmul.mubr.f32.gmra.mrb[0].mxu0 %v65
    %v162 = vpop.f32.mrb[0].mxu0
    %v163 = vadd.f32 %v49, %v162
    %v164 = vpop.f32.mrb[0].mxu0
    %165 = vmatprep.mubr.f32.mxu0 0.0
    %166 = vmatmul.mubr.f32.gmra.mrb[0].mxu0 %v68
    %v167 = vpop.f32.mrb[0].mxu0
    %v168 = vadd.f32 %v49, %v167
    %v169 = vpop.f32.mrb[0].mxu0
    %170 = vmatprep.mubr.f32.mxu0 0.0
    %171 = vmatmul.mubr.f32.gmra.mrb[0].mxu0 %v71
    %v172 = vpop.f32.mrb[0].mxu0
    %v173 = vadd.f32 %v49, %v172
    %v174 = vpop.f32.mrb[0].mxu0
    %175 = vmatprep.mubr.f32.mxu0 0.0
    %176 = vmatmul.mubr.f32.gmra.mrb[0].mxu0 %v74
    %v177 = vpop.f32.mrb[0].mxu0
    %v178 = vadd.f32 %v49, %v177
    %v179 = vpop.f32.mrb[0].mxu0
    %180 = vdwg.mxu0
    %vm181 = vcmask 261120
    %v183 = vsel %vm181, 0.0, 0
    %185 = vmatprep.subr.mxu0 0.0
    %186 = vmatpush1.msra.mxu0 %v32
    %187 = vmatprep.subr.mxu0 0.0
    %188 = vmatpush1.msra.mxu0 %v33
    %189 = vmatprep.subr.mxu0 0.0
    %190 = vmatpush1.msra.mxu0 %v34
    %191 = vmatprep.subr.mxu0 0.0
    %192 = vmatpush1.msra.mxu0 %v35
    %193 = vmatprep.subr.mxu0 0.0
    %194 = vmatpush1.msra.mxu0 0.0
    %195 = vmatprep.subr.mxu0 0.0
    %196 = vmatpush1.msra.mxu0 0.0
    %197 = vmatprep.subr.mxu0 0.0
    %198 = vmatpush1.msra.mxu0 0.0
    %199 = vmatprep.subr.mxu0 0.0
    %200 = vmatpush1.msra.mxu0 0.0
    %201 = vmatprep.subr.mxu0 0.0
    %202 = vmatpush1.msra.mxu0 0.0
    %203 = vmatprep.subr.mxu0 0.0
    %204 = vmatpush1.msra.mxu0 0.0
    %205 = vmatprep.subr.mxu0 0.0
    %206 = vmatpush1.msra.mxu0 0.0
    %207 = vmatprep.subr.mxu0 0.0
    %208 = vmatpush1.msra.mxu0 0.0
    %209 = vmatprep.subr.mxu0 0.0
    %210 = vmatpush1.msra.mxu0 0.0
    %211 = vmatprep.subr.mxu0 0.0
    %212 = vmatpush1.msra.mxu0 0.0
    %213 = vmatprep.subr.mxu0 0.0
    %214 = vmatpush1.msra.mxu0 0.0
    %215 = vmatprep.subr.mxu0 0.0
    %216 = vmatpush1.msra.mxu0 0.0
    %217 = vmatprep.subr.mxu0 0.0
    %218 = vmatpush1.msra.mxu0 0.0
    %219 = vmatprep.subr.mxu0 0.0
    %220 = vmatpush1.msra.mxu0 0.0
    %221 = vmatprep.subr.mxu0 0.0
    %222 = vmatpush1.msra.mxu0 0.0
    %223 = vmatprep.subr.mxu0 0.0
    %224 = vmatpush1.msra.mxu0 0.0
    %225 = vmatprep.subr.mxu0 0.0
    %226 = vmatpush1.msra.mxu0 0.0
    %227 = vmatprep.subr.mxu0 0.0
    %228 = vmatpush1.msra.mxu0 0.0
    %229 = vmatprep.subr.mxu0 0.0
    %230 = vmatpush1.msra.mxu0 0.0
    %231 = vmatprep.subr.mxu0 0.0
    %232 = vmatpush1.msra.mxu0 0.0
    %233 = vmatprep.subr.mxu0 0.0
    %234 = vmatpush1.msra.mxu0 0.0
    %235 = vmatprep.subr.mxu0 0.0
    %236 = vmatpush1.msra.mxu0 0.0
    %237 = vmatprep.subr.mxu0 0.0
    %238 = vmatpush1.msra.mxu0 0.0
    %239 = vmatprep.subr.mxu0 0.0
    %240 = vmatpush1.msra.mxu0 0.0
    %241 = vmatprep.subr.mxu0 0.0
    %242 = vmatpush1.msra.mxu0 0.0
    %243 = vmatprep.subr.mxu0 0.0
    %244 = vmatpush1.msra.mxu0 0.0
    %245 = vmatprep.subr.mxu0 0.0
    %246 = vmatpush1.msra.mxu0 0.0
    %247 = vmatprep.subr.mxu0 0.0
    %248 = vmatpush1.msra.mxu0 0.0
    %249 = vmatprep.mubr.f32.mxu0 0.0
    %250 = vmatmul.mubr.f32.gmra.mrb[0].mxu0 %v183
    %v251 = vpop.f32.mrb[0].mxu0
    %v252 = vadd.f32 0.0, %v251
    %v253 = vpop.f32.mrb[0].mxu0
    %254 = vdwg.mxu0
    %v255 = vadd.f32 %v143, %v252
    %v256 = vxor.u32 %v255, 2147483648
    %v257 = vmul.f32 %v256, 1.442695
    %v258 = vpow.pop %v257
    %v259 = vadd.f32 %v258, 1.0
    %v260 = vrcp.pop %v259
    %v261 = vmul.f32 1.0, %v260
    %v262 = vtanh.pop %v255
    %v263 = vmul.f32 %v261, 0.0
    %265 = vrot.lane.b32.xlu0 %v262, 64
    %v266 = vpop.permute.xlu0 %265
    %v268 = vmul.f32 %v261, %v266
    %270 = vrot.lane.b32.xlu0 %v268, 32
    %v271 = vpop.permute.xlu0 %270
    %v273 = vadd.f32 %v263, %v271
    %v274 = vtanh.pop %v273
    %276 = vrot.lane.b32.xlu0 %v274, 64
    %v277 = vpop.permute.xlu0 %276
    %v279 = vmul.f32 %v261, %v277
    %281 = vrot.lane.b32.xlu0 %v279, 32
    %v282 = vpop.permute.xlu0 %281
    %284 = vst.msk [vmem:[#allocation2] sm:$0xff] %vm181, %v282
    %v285 = vsel %vm181, %v282, 0
    %287 = vmatprep.subr.mxu0 0.0
    %288 = vmatpush1.msra.mxu0 %v32
    %289 = vmatprep.subr.mxu0 0.0
    %290 = vmatpush1.msra.mxu0 %v33
    %291 = vmatprep.subr.mxu0 0.0
    %292 = vmatpush1.msra.mxu0 %v34
    %293 = vmatprep.subr.mxu0 0.0
    %294 = vmatpush1.msra.mxu0 %v35
    %295 = vmatprep.subr.mxu0 0.0
    %296 = vmatpush1.msra.mxu0 0.0
    %297 = vmatprep.subr.mxu0 0.0
    %298 = vmatpush1.msra.mxu0 0.0
    %299 = vmatprep.subr.mxu0 0.0
    %300 = vmatpush1.msra.mxu0 0.0
    %301 = vmatprep.subr.mxu0 0.0
    %302 = vmatpush1.msra.mxu0 0.0
    %303 = vmatprep.subr.mxu0 0.0
    %304 = vmatpush1.msra.mxu0 0.0
    %305 = vmatprep.subr.mxu0 0.0
    %306 = vmatpush1.msra.mxu0 0.0
    %307 = vmatprep.subr.mxu0 0.0
    %308 = vmatpush1.msra.mxu0 0.0
    %309 = vmatprep.subr.mxu0 0.0
    %310 = vmatpush1.msra.mxu0 0.0
    %311 = vmatprep.subr.mxu0 0.0
    %312 = vmatpush1.msra.mxu0 0.0
    %313 = vmatprep.subr.mxu0 0.0
    %314 = vmatpush1.msra.mxu0 0.0
    %315 = vmatprep.subr.mxu0 0.0
    %316 = vmatpush1.msra.mxu0 0.0
    %317 = vmatprep.subr.mxu0 0.0
    %318 = vmatpush1.msra.mxu0 0.0
    %319 = vmatprep.subr.mxu0 0.0
    %320 = vmatpush1.msra.mxu0 0.0
    %321 = vmatprep.subr.mxu0 0.0
    %322 = vmatpush1.msra.mxu0 0.0
    %323 = vmatprep.subr.mxu0 0.0
    %324 = vmatpush1.msra.mxu0 0.0
    %325 = vmatprep.subr.mxu0 0.0
    %326 = vmatpush1.msra.mxu0 0.0
    %327 = vmatprep.subr.mxu0 0.0
    %328 = vmatpush1.msra.mxu0 0.0
    %329 = vmatprep.subr.mxu0 0.0
    %330 = vmatpush1.msra.mxu0 0.0
    %331 = vmatprep.subr.mxu0 0.0
    %332 = vmatpush1.msra.mxu0 0.0
    %333 = vmatprep.subr.mxu0 0.0
    %334 = vmatpush1.msra.mxu0 0.0
    %335 = vmatprep.subr.mxu0 0.0
    %336 = vmatpush1.msra.mxu0 0.0
    %337 = vmatprep.subr.mxu0 0.0
    %338 = vmatpush1.msra.mxu0 0.0
    %339 = vmatprep.subr.mxu0 0.0
    %340 = vmatpush1.msra.mxu0 0.0
    %341 = vmatprep.subr.mxu0 0.0
    %342 = vmatpush1.msra.mxu0 0.0
    %343 = vmatprep.subr.mxu0 0.0
    %344 = vmatpush1.msra.mxu0 0.0
    %345 = vmatprep.subr.mxu0 0.0
    %346 = vmatpush1.msra.mxu0 0.0
    %347 = vmatprep.subr.mxu0 0.0
    %348 = vmatpush1.msra.mxu0 0.0
    %349 = vmatprep.subr.mxu0 0.0
    %350 = vmatpush1.msra.mxu0 0.0
    %351 = vmatprep.mubr.f32.mxu0 0.0
    %352 = vmatmul.mubr.f32.gmra.mrb[0].mxu0 %v285
    %v353 = vpop.f32.mrb[0].mxu0
    %v354 = vadd.f32 0.0, %v353
    %v355 = vpop.f32.mrb[0].mxu0
    %356 = vdwg.mxu0
    %v357 = vadd.f32 %v148, %v354
    %v358 = vxor.u32 %v357, 2147483648
    %v359 = vmul.f32 %v358, 1.442695
    %v360 = vpow.pop %v359
    %v361 = vadd.f32 %v360, 1.0
    %v362 = vrcp.pop %v361
    %v363 = vmul.f32 1.0, %v362
    %v364 = vtanh.pop %v357
    %v365 = vmul.f32 %v363, %v273
    %367 = vrot.lane.b32.xlu0 %v364, 64
    %v368 = vpop.permute.xlu0 %367
    %v370 = vmul.f32 %v363, %v368
    %372 = vrot.lane.b32.xlu0 %v370, 32
    %v373 = vpop.permute.xlu0 %372
    %v375 = vadd.f32 %v365, %v373
    %v376 = vtanh.pop %v375
    %378 = vrot.lane.b32.xlu0 %v376, 64
    %v379 = vpop.permute.xlu0 %378
    %v381 = vmul.f32 %v363, %v379
    %383 = vrot.lane.b32.xlu0 %v381, 32
    %v384 = vpop.permute.xlu0 %383
    %386 = vst.msk [vmem:[#allocation2 + $0x8] sm:$0xff] %vm181, %v384
    %v387 = vsel %vm181, %v384, 0
    %389 = vmatprep.subr.mxu0 0.0
    %390 = vmatpush1.msra.mxu0 %v32
    %391 = vmatprep.subr.mxu0 0.0
    %392 = vmatpush1.msra.mxu0 %v33
    %393 = vmatprep.subr.mxu0 0.0
    %394 = vmatpush1.msra.mxu0 %v34
    %395 = vmatprep.subr.mxu0 0.0
    %396 = vmatpush1.msra.mxu0 %v35
    %397 = vmatprep.subr.mxu0 0.0
    %398 = vmatpush1.msra.mxu0 0.0
    %399 = vmatprep.subr.mxu0 0.0
    %400 = vmatpush1.msra.mxu0 0.0
    %401 = vmatprep.subr.mxu0 0.0
    %402 = vmatpush1.msra.mxu0 0.0
    %403 = vmatprep.subr.mxu0 0.0
    %404 = vmatpush1.msra.mxu0 0.0
    %405 = vmatprep.subr.mxu0 0.0
    %406 = vmatpush1.msra.mxu0 0.0
    %407 = vmatprep.subr.mxu0 0.0
    %408 = vmatpush1.msra.mxu0 0.0
    %409 = vmatprep.subr.mxu0 0.0
    %410 = vmatpush1.msra.mxu0 0.0
    %411 = vmatprep.subr.mxu0 0.0
    %412 = vmatpush1.msra.mxu0 0.0
    %413 = vmatprep.subr.mxu0 0.0
    %414 = vmatpush1.msra.mxu0 0.0
    %415 = vmatprep.subr.mxu0 0.0
    %416 = vmatpush1.msra.mxu0 0.0
    %417 = vmatprep.subr.mxu0 0.0
    %418 = vmatpush1.msra.mxu0 0.0
    %419 = vmatprep.subr.mxu0 0.0
    %420 = vmatpush1.msra.mxu0 0.0
    %421 = vmatprep.subr.mxu0 0.0
    %422 = vmatpush1.msra.mxu0 0.0
    %423 = vmatprep.subr.mxu0 0.0
    %424 = vmatpush1.msra.mxu0 0.0
    %425 = vmatprep.subr.mxu0 0.0
    %426 = vmatpush1.msra.mxu0 0.0
    %427 = vmatprep.subr.mxu0 0.0
    %428 = vmatpush1.msra.mxu0 0.0
    %429 = vmatprep.subr.mxu0 0.0
    %430 = vmatpush1.msra.mxu0 0.0
    %431 = vmatprep.subr.mxu0 0.0
    %432 = vmatpush1.msra.mxu0 0.0
    %433 = vmatprep.subr.mxu0 0.0
    %434 = vmatpush1.msra.mxu0 0.0
    %435 = vmatprep.subr.mxu0 0.0
    %436 = vmatpush1.msra.mxu0 0.0
    %437 = vmatprep.subr.mxu0 0.0
    %438 = vmatpush1.msra.mxu0 0.0
    %439 = vmatprep.subr.mxu0 0.0
    %440 = vmatpush1.msra.mxu0 0.0
    %441 = vmatprep.subr.mxu0 0.0
    %442 = vmatpush1.msra.mxu0 0.0
    %443 = vmatprep.subr.mxu0 0.0
    %444 = vmatpush1.msra.mxu0 0.0
    %445 = vmatprep.subr.mxu0 0.0
    %446 = vmatpush1.msra.mxu0 0.0
    %447 = vmatprep.subr.mxu0 0.0
    %448 = vmatpush1.msra.mxu0 0.0
    %449 = vmatprep.subr.mxu0 0.0
    %450 = vmatpush1.msra.mxu0 0.0
    %451 = vmatprep.subr.mxu0 0.0
    %452 = vmatpush1.msra.mxu0 0.0
    %453 = vmatprep.mubr.f32.mxu0 0.0
    %454 = vmatmul.mubr.f32.gmra.mrb[0].mxu0 %v387
    %v455 = vpop.f32.mrb[0].mxu0
    %v456 = vadd.f32 0.0, %v455
    %v457 = vpop.f32.mrb[0].mxu0
    %458 = vdwg.mxu0
    %v459 = vadd.f32 %v153, %v456
    %v460 = vxor.u32 %v459, 2147483648
    %v461 = vmul.f32 %v460, 1.442695
    %v462 = vpow.pop %v461
    %v463 = vadd.f32 %v462, 1.0
    %v464 = vrcp.pop %v463
    %v465 = vmul.f32 1.0, %v464
    %v466 = vtanh.pop %v459
    %v467 = vmul.f32 %v465, %v375
    %469 = vrot.lane.b32.xlu0 %v466, 64
    %v470 = vpop.permute.xlu0 %469
    %v472 = vmul.f32 %v465, %v470
    %474 = vrot.lane.b32.xlu0 %v472, 32
    %v475 = vpop.permute.xlu0 %474
    %v477 = vadd.f32 %v467, %v475
    %v478 = vtanh.pop %v477
    %480 = vrot.lane.b32.xlu0 %v478, 64
    %v481 = vpop.permute.xlu0 %480
    %v483 = vmul.f32 %v465, %v481
    %485 = vrot.lane.b32.xlu0 %v483, 32
    %v486 = vpop.permute.xlu0 %485
    %488 = vst.msk [vmem:[#allocation2 + $0x10] sm:$0xff] %vm181, %v486
    %v489 = vsel %vm181, %v486, 0
    %491 = vmatprep.subr.mxu0 0.0
    %492 = vmatpush1.msra.mxu0 %v32
    %493 = vmatprep.subr.mxu0 0.0
    %494 = vmatpush1.msra.mxu0 %v33
    %495 = vmatprep.subr.mxu0 0.0
    %496 = vmatpush1.msra.mxu0 %v34
    %497 = vmatprep.subr.mxu0 0.0
    %498 = vmatpush1.msra.mxu0 %v35
    %499 = vmatprep.subr.mxu0 0.0
    %500 = vmatpush1.msra.mxu0 0.0
    %501 = vmatprep.subr.mxu0 0.0
    %502 = vmatpush1.msra.mxu0 0.0
    %503 = vmatprep.subr.mxu0 0.0
    %504 = vmatpush1.msra.mxu0 0.0
    %505 = vmatprep.subr.mxu0 0.0
    %506 = vmatpush1.msra.mxu0 0.0
    %507 = vmatprep.subr.mxu0 0.0
    %508 = vmatpush1.msra.mxu0 0.0
    %509 = vmatprep.subr.mxu0 0.0
    %510 = vmatpush1.msra.mxu0 0.0
    %511 = vmatprep.subr.mxu0 0.0
    %512 = vmatpush1.msra.mxu0 0.0
    %513 = vmatprep.subr.mxu0 0.0
    %514 = vmatpush1.msra.mxu0 0.0
    %515 = vmatprep.subr.mxu0 0.0
    %516 = vmatpush1.msra.mxu0 0.0
    %517 = vmatprep.subr.mxu0 0.0
    %518 = vmatpush1.msra.mxu0 0.0
    %519 = vmatprep.subr.mxu0 0.0
    %520 = vmatpush1.msra.mxu0 0.0
    %521 = vmatprep.subr.mxu0 0.0
    %522 = vmatpush1.msra.mxu0 0.0
    %523 = vmatprep.subr.mxu0 0.0
    %524 = vmatpush1.msra.mxu0 0.0
    %525 = vmatprep.subr.mxu0 0.0
    %526 = vmatpush1.msra.mxu0 0.0
    %527 = vmatprep.subr.mxu0 0.0
    %528 = vmatpush1.msra.mxu0 0.0
    %529 = vmatprep.subr.mxu0 0.0
    %530 = vmatpush1.msra.mxu0 0.0
    %531 = vmatprep.subr.mxu0 0.0
    %532 = vmatpush1.msra.mxu0 0.0
    %533 = vmatprep.subr.mxu0 0.0
    %534 = vmatpush1.msra.mxu0 0.0
    %535 = vmatprep.subr.mxu0 0.0
    %536 = vmatpush1.msra.mxu0 0.0
    %537 = vmatprep.subr.mxu0 0.0
    %538 = vmatpush1.msra.mxu0 0.0
    %539 = vmatprep.subr.mxu0 0.0
    %540 = vmatpush1.msra.mxu0 0.0
    %541 = vmatprep.subr.mxu0 0.0
    %542 = vmatpush1.msra.mxu0 0.0
    %543 = vmatprep.subr.mxu0 0.0
    %544 = vmatpush1.msra.mxu0 0.0
    %545 = vmatprep.subr.mxu0 0.0
    %546 = vmatpush1.msra.mxu0 0.0
    %547 = vmatprep.subr.mxu0 0.0
    %548 = vmatpush1.msra.mxu0 0.0
    %549 = vmatprep.subr.mxu0 0.0
    %550 = vmatpush1.msra.mxu0 0.0
    %551 = vmatprep.subr.mxu0 0.0
    %552 = vmatpush1.msra.mxu0 0.0
    %553 = vmatprep.subr.mxu0 0.0
    %554 = vmatpush1.msra.mxu0 0.0
    %555 = vmatprep.mubr.f32.mxu0 0.0
    %556 = vmatmul.mubr.f32.gmra.mrb[0].mxu0 %v489
    %v557 = vpop.f32.mrb[0].mxu0
    %v558 = vadd.f32 0.0, %v557
    %v559 = vpop.f32.mrb[0].mxu0
    %560 = vdwg.mxu0
    %v561 = vadd.f32 %v158, %v558
    %v562 = vxor.u32 %v561, 2147483648
    %v563 = vmul.f32 %v562, 1.442695
    %v564 = vpow.pop %v563
    %v565 = vadd.f32 %v564, 1.0
    %v566 = vrcp.pop %v565
    %v567 = vmul.f32 1.0, %v566
    %v568 = vtanh.pop %v561
    %v569 = vmul.f32 %v567, %v477
    %571 = vrot.lane.b32.xlu0 %v568, 64
    %v572 = vpop.permute.xlu0 %571
    %v574 = vmul.f32 %v567, %v572
    %576 = vrot.lane.b32.xlu0 %v574, 32
    %v577 = vpop.permute.xlu0 %576
    %v579 = vadd.f32 %v569, %v577
    %v580 = vtanh.pop %v579
    %582 = vrot.lane.b32.xlu0 %v580, 64
    %v583 = vpop.permute.xlu0 %582
    %v585 = vmul.f32 %v567, %v583
    %587 = vrot.lane.b32.xlu0 %v585, 32
    %v588 = vpop.permute.xlu0 %587
    %590 = vst.msk [vmem:[#allocation2 + $0x18] sm:$0xff] %vm181, %v588
    %v591 = vsel %vm181, %v588, 0
    %593 = vmatprep.subr.mxu0 0.0
    %594 = vmatpush1.msra.mxu0 %v32
    %595 = vmatprep.subr.mxu0 0.0
    %596 = vmatpush1.msra.mxu0 %v33
    %597 = vmatprep.subr.mxu0 0.0
    %598 = vmatpush1.msra.mxu0 %v34
    %599 = vmatprep.subr.mxu0 0.0
    %600 = vmatpush1.msra.mxu0 %v35
    %601 = vmatprep.subr.mxu0 0.0
    %602 = vmatpush1.msra.mxu0 0.0
    %603 = vmatprep.subr.mxu0 0.0
    %604 = vmatpush1.msra.mxu0 0.0
    %605 = vmatprep.subr.mxu0 0.0
    %606 = vmatpush1.msra.mxu0 0.0
    %607 = vmatprep.subr.mxu0 0.0
    %608 = vmatpush1.msra.mxu0 0.0
    %609 = vmatprep.subr.mxu0 0.0
    %610 = vmatpush1.msra.mxu0 0.0
    %611 = vmatprep.subr.mxu0 0.0
    %612 = vmatpush1.msra.mxu0 0.0
    %613 = vmatprep.subr.mxu0 0.0
    %614 = vmatpush1.msra.mxu0 0.0
    %615 = vmatprep.subr.mxu0 0.0
    %616 = vmatpush1.msra.mxu0 0.0
    %617 = vmatprep.subr.mxu0 0.0
    %618 = vmatpush1.msra.mxu0 0.0
    %619 = vmatprep.subr.mxu0 0.0
    %620 = vmatpush1.msra.mxu0 0.0
    %621 = vmatprep.subr.mxu0 0.0
    %622 = vmatpush1.msra.mxu0 0.0
    %623 = vmatprep.subr.mxu0 0.0
    %624 = vmatpush1.msra.mxu0 0.0
    %625 = vmatprep.subr.mxu0 0.0
    %626 = vmatpush1.msra.mxu0 0.0
    %627 = vmatprep.subr.mxu0 0.0
    %628 = vmatpush1.msra.mxu0 0.0
    %629 = vmatprep.subr.mxu0 0.0
    %630 = vmatpush1.msra.mxu0 0.0
    %631 = vmatprep.subr.mxu0 0.0
    %632 = vmatpush1.msra.mxu0 0.0
    %633 = vmatprep.subr.mxu0 0.0
    %634 = vmatpush1.msra.mxu0 0.0
    %635 = vmatprep.subr.mxu0 0.0
    %636 = vmatpush1.msra.mxu0 0.0
    %637 = vmatprep.subr.mxu0 0.0
    %638 = vmatpush1.msra.mxu0 0.0
    %639 = vmatprep.subr.mxu0 0.0
    %640 = vmatpush1.msra.mxu0 0.0
    %641 = vmatprep.subr.mxu0 0.0
    %642 = vmatpush1.msra.mxu0 0.0
    %643 = vmatprep.subr.mxu0 0.0
    %644 = vmatpush1.msra.mxu0 0.0
    %645 = vmatprep.subr.mxu0 0.0
    %646 = vmatpush1.msra.mxu0 0.0
    %647 = vmatprep.subr.mxu0 0.0
    %648 = vmatpush1.msra.mxu0 0.0
    %649 = vmatprep.subr.mxu0 0.0
    %650 = vmatpush1.msra.mxu0 0.0
    %651 = vmatprep.subr.mxu0 0.0
    %652 = vmatpush1.msra.mxu0 0.0
    %653 = vmatprep.subr.mxu0 0.0
    %654 = vmatpush1.msra.mxu0 0.0
    %655 = vmatprep.subr.mxu0 0.0
    %656 = vmatpush1.msra.mxu0 0.0
    %657 = vmatprep.mubr.f32.mxu0 0.0
    %658 = vmatmul.mubr.f32.gmra.mrb[0].mxu0 %v591
    %v659 = vpop.f32.mrb[0].mxu0
    %v660 = vadd.f32 0.0, %v659
    %v661 = vpop.f32.mrb[0].mxu0
    %662 = vdwg.mxu0
    %v663 = vadd.f32 %v163, %v660
    %v664 = vxor.u32 %v663, 2147483648
    %v665 = vmul.f32 %v664, 1.442695
    %v666 = vpow.pop %v665
    %v667 = vadd.f32 %v666, 1.0
    %v668 = vrcp.pop %v667
    %v669 = vmul.f32 1.0, %v668
    %v670 = vtanh.pop %v663
    %v671 = vmul.f32 %v669, %v579
    %673 = vrot.lane.b32.xlu0 %v670, 64
    %v674 = vpop.permute.xlu0 %673
    %v676 = vmul.f32 %v669, %v674
    %678 = vrot.lane.b32.xlu0 %v676, 32
    %v679 = vpop.permute.xlu0 %678
    %v681 = vadd.f32 %v671, %v679
    %v682 = vtanh.pop %v681
    %684 = vrot.lane.b32.xlu0 %v682, 64
    %v685 = vpop.permute.xlu0 %684
    %v687 = vmul.f32 %v669, %v685
    %689 = vrot.lane.b32.xlu0 %v687, 32
    %v690 = vpop.permute.xlu0 %689
    %692 = vst.msk [vmem:[#allocation2 + $0x20] sm:$0xff] %vm181, %v690
    %v693 = vsel %vm181, %v690, 0
    %695 = vmatprep.subr.mxu0 0.0
    %696 = vmatpush1.msra.mxu0 %v32
    %697 = vmatprep.subr.mxu0 0.0
    %698 = vmatpush1.msra.mxu0 %v33
    %699 = vmatprep.subr.mxu0 0.0
    %700 = vmatpush1.msra.mxu0 %v34
    %701 = vmatprep.subr.mxu0 0.0
    %702 = vmatpush1.msra.mxu0 %v35
    %703 = vmatprep.subr.mxu0 0.0
    %704 = vmatpush1.msra.mxu0 0.0
    %705 = vmatprep.subr.mxu0 0.0
    %706 = vmatpush1.msra.mxu0 0.0
    %707 = vmatprep.subr.mxu0 0.0
    %708 = vmatpush1.msra.mxu0 0.0
    %709 = vmatprep.subr.mxu0 0.0
    %710 = vmatpush1.msra.mxu0 0.0
    %711 = vmatprep.subr.mxu0 0.0
    %712 = vmatpush1.msra.mxu0 0.0
    %713 = vmatprep.subr.mxu0 0.0
    %714 = vmatpush1.msra.mxu0 0.0
    %715 = vmatprep.subr.mxu0 0.0
    %716 = vmatpush1.msra.mxu0 0.0
    %717 = vmatprep.subr.mxu0 0.0
    %718 = vmatpush1.msra.mxu0 0.0
    %719 = vmatprep.subr.mxu0 0.0
    %720 = vmatpush1.msra.mxu0 0.0
    %721 = vmatprep.subr.mxu0 0.0
    %722 = vmatpush1.msra.mxu0 0.0
    %723 = vmatprep.subr.mxu0 0.0
    %724 = vmatpush1.msra.mxu0 0.0
    %725 = vmatprep.subr.mxu0 0.0
    %726 = vmatpush1.msra.mxu0 0.0
    %727 = vmatprep.subr.mxu0 0.0
    %728 = vmatpush1.msra.mxu0 0.0
    %729 = vmatprep.subr.mxu0 0.0
    %730 = vmatpush1.msra.mxu0 0.0
    %731 = vmatprep.subr.mxu0 0.0
    %732 = vmatpush1.msra.mxu0 0.0
    %733 = vmatprep.subr.mxu0 0.0
    %734 = vmatpush1.msra.mxu0 0.0
    %735 = vmatprep.subr.mxu0 0.0
    %736 = vmatpush1.msra.mxu0 0.0
    %737 = vmatprep.subr.mxu0 0.0
    %738 = vmatpush1.msra.mxu0 0.0
    %739 = vmatprep.subr.mxu0 0.0
    %740 = vmatpush1.msra.mxu0 0.0
    %741 = vmatprep.subr.mxu0 0.0
    %742 = vmatpush1.msra.mxu0 0.0
    %743 = vmatprep.subr.mxu0 0.0
    %744 = vmatpush1.msra.mxu0 0.0
    %745 = vmatprep.subr.mxu0 0.0
    %746 = vmatpush1.msra.mxu0 0.0
    %747 = vmatprep.subr.mxu0 0.0
    %748 = vmatpush1.msra.mxu0 0.0
    %749 = vmatprep.subr.mxu0 0.0
    %750 = vmatpush1.msra.mxu0 0.0
    %751 = vmatprep.subr.mxu0 0.0
    %752 = vmatpush1.msra.mxu0 0.0
    %753 = vmatprep.subr.mxu0 0.0
    %754 = vmatpush1.msra.mxu0 0.0
    %755 = vmatprep.subr.mxu0 0.0
    %756 = vmatpush1.msra.mxu0 0.0
    %757 = vmatprep.subr.mxu0 0.0
    %758 = vmatpush1.msra.mxu0 0.0
    %759 = vmatprep.mubr.f32.mxu0 0.0
    %760 = vmatmul.mubr.f32.gmra.mrb[0].mxu0 %v693
    %v761 = vpop.f32.mrb[0].mxu0
    %v762 = vadd.f32 0.0, %v761
    %v763 = vpop.f32.mrb[0].mxu0
    %764 = vdwg.mxu0
    %v765 = vadd.f32 %v168, %v762
    %v766 = vxor.u32 %v765, 2147483648
    %v767 = vmul.f32 %v766, 1.442695
    %v768 = vpow.pop %v767
    %v769 = vadd.f32 %v768, 1.0
    %v770 = vrcp.pop %v769
    %v771 = vmul.f32 1.0, %v770
    %v772 = vtanh.pop %v765
    %v773 = vmul.f32 %v771, %v681
    %775 = vrot.lane.b32.xlu0 %v772, 64
    %v776 = vpop.permute.xlu0 %775
    %v778 = vmul.f32 %v771, %v776
    %780 = vrot.lane.b32.xlu0 %v778, 32
    %v781 = vpop.permute.xlu0 %780
    %v783 = vadd.f32 %v773, %v781
    %v784 = vtanh.pop %v783
    %786 = vrot.lane.b32.xlu0 %v784, 64
    %v787 = vpop.permute.xlu0 %786
    %v789 = vmul.f32 %v771, %v787
    %791 = vrot.lane.b32.xlu0 %v789, 32
    %v792 = vpop.permute.xlu0 %791
    %794 = vst.msk [vmem:[#allocation2 + $0x28] sm:$0xff] %vm181, %v792
    %v795 = vsel %vm181, %v792, 0
    %797 = vmatprep.subr.mxu0 0.0
    %798 = vmatpush1.msra.mxu0 %v32
    %799 = vmatprep.subr.mxu0 0.0
    %800 = vmatpush1.msra.mxu0 %v33
    %801 = vmatprep.subr.mxu0 0.0
    %802 = vmatpush1.msra.mxu0 %v34
    %803 = vmatprep.subr.mxu0 0.0
    %804 = vmatpush1.msra.mxu0 %v35
    %805 = vmatprep.subr.mxu0 0.0
    %806 = vmatpush1.msra.mxu0 0.0
    %807 = vmatprep.subr.mxu0 0.0
    %808 = vmatpush1.msra.mxu0 0.0
    %809 = vmatprep.subr.mxu0 0.0
    %810 = vmatpush1.msra.mxu0 0.0
    %811 = vmatprep.subr.mxu0 0.0
    %812 = vmatpush1.msra.mxu0 0.0
    %813 = vmatprep.subr.mxu0 0.0
    %814 = vmatpush1.msra.mxu0 0.0
    %815 = vmatprep.subr.mxu0 0.0
    %816 = vmatpush1.msra.mxu0 0.0
    %817 = vmatprep.subr.mxu0 0.0
    %818 = vmatpush1.msra.mxu0 0.0
    %819 = vmatprep.subr.mxu0 0.0
    %820 = vmatpush1.msra.mxu0 0.0
    %821 = vmatprep.subr.mxu0 0.0
    %822 = vmatpush1.msra.mxu0 0.0
    %823 = vmatprep.subr.mxu0 0.0
    %824 = vmatpush1.msra.mxu0 0.0
    %825 = vmatprep.subr.mxu0 0.0
    %826 = vmatpush1.msra.mxu0 0.0
    %827 = vmatprep.subr.mxu0 0.0
    %828 = vmatpush1.msra.mxu0 0.0
    %829 = vmatprep.subr.mxu0 0.0
    %830 = vmatpush1.msra.mxu0 0.0
    %831 = vmatprep.subr.mxu0 0.0
    %832 = vmatpush1.msra.mxu0 0.0
    %833 = vmatprep.subr.mxu0 0.0
    %834 = vmatpush1.msra.mxu0 0.0
    %835 = vmatprep.subr.mxu0 0.0
    %836 = vmatpush1.msra.mxu0 0.0
    %837 = vmatprep.subr.mxu0 0.0
    %838 = vmatpush1.msra.mxu0 0.0
    %839 = vmatprep.subr.mxu0 0.0
    %840 = vmatpush1.msra.mxu0 0.0
    %841 = vmatprep.subr.mxu0 0.0
    %842 = vmatpush1.msra.mxu0 0.0
    %843 = vmatprep.subr.mxu0 0.0
    %844 = vmatpush1.msra.mxu0 0.0
    %845 = vmatprep.subr.mxu0 0.0
    %846 = vmatpush1.msra.mxu0 0.0
    %847 = vmatprep.subr.mxu0 0.0
    %848 = vmatpush1.msra.mxu0 0.0
    %849 = vmatprep.subr.mxu0 0.0
    %850 = vmatpush1.msra.mxu0 0.0
    %851 = vmatprep.subr.mxu0 0.0
    %852 = vmatpush1.msra.mxu0 0.0
    %853 = vmatprep.subr.mxu0 0.0
    %854 = vmatpush1.msra.mxu0 0.0
    %855 = vmatprep.subr.mxu0 0.0
    %856 = vmatpush1.msra.mxu0 0.0
    %857 = vmatprep.subr.mxu0 0.0
    %858 = vmatpush1.msra.mxu0 0.0
    %859 = vmatprep.subr.mxu0 0.0
    %860 = vmatpush1.msra.mxu0 0.0
    %861 = vmatprep.mubr.f32.mxu0 0.0
    %862 = vmatmul.mubr.f32.gmra.mrb[0].mxu0 %v795
    %v863 = vpop.f32.mrb[0].mxu0
    %v864 = vadd.f32 0.0, %v863
    %v865 = vpop.f32.mrb[0].mxu0
    %866 = vdwg.mxu0
    %v867 = vadd.f32 %v173, %v864
    %v868 = vxor.u32 %v867, 2147483648
    %v869 = vmul.f32 %v868, 1.442695
    %v870 = vpow.pop %v869
    %v871 = vadd.f32 %v870, 1.0
    %v872 = vrcp.pop %v871
    %v873 = vmul.f32 1.0, %v872
    %v874 = vtanh.pop %v867
    %v875 = vmul.f32 %v873, %v783
    %877 = vrot.lane.b32.xlu0 %v874, 64
    %v878 = vpop.permute.xlu0 %877
    %v880 = vmul.f32 %v873, %v878
    %882 = vrot.lane.b32.xlu0 %v880, 32
    %v883 = vpop.permute.xlu0 %882
    %v885 = vadd.f32 %v875, %v883
    %v886 = vtanh.pop %v885
    %888 = vrot.lane.b32.xlu0 %v886, 64
    %v889 = vpop.permute.xlu0 %888
    %v891 = vmul.f32 %v873, %v889
    %893 = vrot.lane.b32.xlu0 %v891, 32
    %v894 = vpop.permute.xlu0 %893
    %896 = vst.msk [vmem:[#allocation2 + $0x30] sm:$0xff] %vm181, %v894
    %v897 = vsel %vm181, %v894, 0
    %899 = vmatprep.subr.mxu0 0.0
    %900 = vmatpush1.msra.mxu0 %v32
    %901 = vmatprep.subr.mxu0 0.0
    %902 = vmatpush1.msra.mxu0 %v33
    %903 = vmatprep.subr.mxu0 0.0
    %904 = vmatpush1.msra.mxu0 %v34
    %905 = vmatprep.subr.mxu0 0.0
    %906 = vmatpush1.msra.mxu0 %v35
    %907 = vmatprep.subr.mxu0 0.0
    %908 = vmatpush1.msra.mxu0 0.0
    %909 = vmatprep.subr.mxu0 0.0
    %910 = vmatpush1.msra.mxu0 0.0
    %911 = vmatprep.subr.mxu0 0.0
    %912 = vmatpush1.msra.mxu0 0.0
    %913 = vmatprep.subr.mxu0 0.0
    %914 = vmatpush1.msra.mxu0 0.0
    %915 = vmatprep.subr.mxu0 0.0
    %916 = vmatpush1.msra.mxu0 0.0
    %917 = vmatprep.subr.mxu0 0.0
    %918 = vmatpush1.msra.mxu0 0.0
    %919 = vmatprep.subr.mxu0 0.0
    %920 = vmatpush1.msra.mxu0 0.0
    %921 = vmatprep.subr.mxu0 0.0
    %922 = vmatpush1.msra.mxu0 0.0
    %923 = vmatprep.subr.mxu0 0.0
    %924 = vmatpush1.msra.mxu0 0.0
    %925 = vmatprep.subr.mxu0 0.0
    %926 = vmatpush1.msra.mxu0 0.0
    %927 = vmatprep.subr.mxu0 0.0
    %928 = vmatpush1.msra.mxu0 0.0
    %929 = vmatprep.subr.mxu0 0.0
    %930 = vmatpush1.msra.mxu0 0.0
    %931 = vmatprep.subr.mxu0 0.0
    %932 = vmatpush1.msra.mxu0 0.0
    %933 = vmatprep.subr.mxu0 0.0
    %934 = vmatpush1.msra.mxu0 0.0
    %935 = vmatprep.subr.mxu0 0.0
    %936 = vmatpush1.msra.mxu0 0.0
    %937 = vmatprep.subr.mxu0 0.0
    %938 = vmatpush1.msra.mxu0 0.0
    %939 = vmatprep.subr.mxu0 0.0
    %940 = vmatpush1.msra.mxu0 0.0
    %941 = vmatprep.subr.mxu0 0.0
    %942 = vmatpush1.msra.mxu0 0.0
    %943 = vmatprep.subr.mxu0 0.0
    %944 = vmatpush1.msra.mxu0 0.0
    %945 = vmatprep.subr.mxu0 0.0
    %946 = vmatpush1.msra.mxu0 0.0
    %947 = vmatprep.subr.mxu0 0.0
    %948 = vmatpush1.msra.mxu0 0.0
    %949 = vmatprep.subr.mxu0 0.0
    %950 = vmatpush1.msra.mxu0 0.0
    %951 = vmatprep.subr.mxu0 0.0
    %952 = vmatpush1.msra.mxu0 0.0
    %953 = vmatprep.subr.mxu0 0.0
    %954 = vmatpush1.msra.mxu0 0.0
    %955 = vmatprep.subr.mxu0 0.0
    %956 = vmatpush1.msra.mxu0 0.0
    %957 = vmatprep.subr.mxu0 0.0
    %958 = vmatpush1.msra.mxu0 0.0
    %959 = vmatprep.subr.mxu0 0.0
    %960 = vmatpush1.msra.mxu0 0.0
    %961 = vmatprep.subr.mxu0 0.0
    %962 = vmatpush1.msra.mxu0 0.0
    %963 = vmatprep.mubr.f32.mxu0 0.0
    %964 = vmatmul.mubr.f32.gmra.mrb[0].mxu0 %v897
    %v965 = vpop.f32.mrb[0].mxu0
    %v966 = vadd.f32 0.0, %v965
    %v967 = vpop.f32.mrb[0].mxu0
    %968 = vdwg.mxu0
    %v969 = vadd.f32 %v178, %v966
    %v970 = vxor.u32 %v969, 2147483648
    %v971 = vmul.f32 %v970, 1.442695
    %v972 = vpow.pop %v971
    %v973 = vadd.f32 %v972, 1.0
    %v974 = vrcp.pop %v973
    %v975 = vmul.f32 1.0, %v974
    %v976 = vtanh.pop %v969
    %v977 = vmul.f32 %v975, %v885
    %979 = vrot.lane.b32.xlu0 %v976, 64
    %v980 = vpop.permute.xlu0 %979
    %v982 = vmul.f32 %v975, %v980
    %984 = vrot.lane.b32.xlu0 %v982, 32
    %v985 = vpop.permute.xlu0 %984
    %v987 = vadd.f32 %v977, %v985
    %v988 = vtanh.pop %v987
    %990 = vrot.lane.b32.xlu0 %v988, 64
    %v991 = vpop.permute.xlu0 %990
    %v993 = vmul.f32 %v975, %v991
    %995 = vrot.lane.b32.xlu0 %v993, 32
    %v996 = vpop.permute.xlu0 %995
    %998 = vst.msk [vmem:[#allocation2 + $0x38] sm:$0xff] %vm181, %v996
    %999 = vst.msk [vmem:[#allocation3] sm:$0xff] %vm181, %v996
    %1001 = vrot.lane.b32.xlu0 %v987, 96
    %v1002 = vpop.permute.xlu0 %1001
    %1004 = vst.msk [vmem:[#allocation5] sm:$0xff] %vm181, %v1002
    %v1005 = vld [vmem:[%s4] sm:$0xff]
    %v1006 = vld [vmem:[%s4 + $0x8] sm:$0xff]
    %v1007 = vld [vmem:[%s4 + $0x10] sm:$0xff]
    %v1008 = vld [vmem:[%s4 + $0x18] sm:$0xff]
    %v1009 = vld [vmem:[%s5] sm:$0xff]
    %v1010 = vld [vmem:[%s5 + $0x8] sm:$0xff]
    %v1011 = vld [vmem:[%s5 + $0x10] sm:$0xff]
    %v1012 = vld [vmem:[%s5 + $0x18] sm:$0xff]
    %v1013 = vld [vmem:[%s6] sm:$0x1]
    %v1014 = vld [vmem:[#allocation2] sm:$0xff]
    %v1015 = vld [vmem:[#allocation2 + $0x8] sm:$0xff]
    %v1016 = vld [vmem:[#allocation2 + $0x10] sm:$0xff]
    %v1017 = vld [vmem:[#allocation2 + $0x18] sm:$0xff]
    %v1018 = vld [vmem:[#allocation2 + $0x20] sm:$0xff]
    %v1019 = vld [vmem:[#allocation2 + $0x28] sm:$0xff]
    %v1020 = vld [vmem:[#allocation2 + $0x30] sm:$0xff]
    %v1021 = vld [vmem:[#allocation2 + $0x38] sm:$0xff]
    %v1023 = vlaneseq
    %v1024 = vshrl.u32 %v1023, 7
    %v1025 = vsub.s32 0, %v1024
    %v1026 = vrot.slane %v1013, %v1025
    %v1029 = vsel %vm181, %v1014, 0
    %v1032 = vsel %vm181, %v1015, 0
    %v1035 = vsel %vm181, %v1016, 0
    %v1038 = vsel %vm181, %v1017, 0
    %v1041 = vsel %vm181, %v1018, 0
    %v1044 = vsel %vm181, %v1019, 0
    %v1047 = vsel %vm181, %v1020, 0
    %v1050 = vsel %vm181, %v1021, 0
    %1052 = vmatprep.subr.mxu0 0.0
    %1053 = vmatpush1.msra.mxu0 %v1005
    %1054 = vmatprep.subr.mxu0 0.0
    %1055 = vmatpush1.msra.mxu0 %v1006
    %1056 = vmatprep.subr.mxu0 0.0
    %1057 = vmatpush1.msra.mxu0 %v1007
    %1058 = vmatprep.subr.mxu0 0.0
    %1059 = vmatpush1.msra.mxu0 %v1008
    %1060 = vmatprep.subr.mxu0 0.0
    %1061 = vmatpush1.msra.mxu0 0.0
    %1062 = vmatprep.subr.mxu0 0.0
    %1063 = vmatpush1.msra.mxu0 0.0
    %1064 = vmatprep.subr.mxu0 0.0
    %1065 = vmatpush1.msra.mxu0 0.0
    %1066 = vmatprep.subr.mxu0 0.0
    %1067 = vmatpush1.msra.mxu0 0.0
    %1068 = vmatprep.subr.mxu0 0.0
    %1069 = vmatpush1.msra.mxu0 0.0
    %1070 = vmatprep.subr.mxu0 0.0
    %1071 = vmatpush1.msra.mxu0 0.0
    %1072 = vmatprep.subr.mxu0 0.0
    %1073 = vmatpush1.msra.mxu0 0.0
    %1074 = vmatprep.subr.mxu0 0.0
    %1075 = vmatpush1.msra.mxu0 0.0
    %1076 = vmatprep.subr.mxu0 0.0
    %1077 = vmatpush1.msra.mxu0 0.0
    %1078 = vmatprep.subr.mxu0 0.0
    %1079 = vmatpush1.msra.mxu0 0.0
    %1080 = vmatprep.subr.mxu0 0.0
    %1081 = vmatpush1.msra.mxu0 0.0
    %1082 = vmatprep.subr.mxu0 0.0
    %1083 = vmatpush1.msra.mxu0 0.0
    %1084 = vmatprep.subr.mxu0 0.0
    %1085 = vmatpush1.msra.mxu0 0.0
    %1086 = vmatprep.subr.mxu0 0.0
    %1087 = vmatpush1.msra.mxu0 0.0
    %1088 = vmatprep.subr.mxu0 0.0
    %1089 = vmatpush1.msra.mxu0 0.0
    %1090 = vmatprep.subr.mxu0 0.0
    %1091 = vmatpush1.msra.mxu0 0.0
    %1092 = vmatprep.subr.mxu0 0.0
    %1093 = vmatpush1.msra.mxu0 0.0
    %1094 = vmatprep.subr.mxu0 0.0
    %1095 = vmatpush1.msra.mxu0 0.0
    %1096 = vmatprep.subr.mxu0 0.0
    %1097 = vmatpush1.msra.mxu0 0.0
    %1098 = vmatprep.subr.mxu0 0.0
    %1099 = vmatpush1.msra.mxu0 0.0
    %1100 = vmatprep.subr.mxu0 0.0
    %1101 = vmatpush1.msra.mxu0 0.0
    %1102 = vmatprep.subr.mxu0 0.0
    %1103 = vmatpush1.msra.mxu0 0.0
    %1104 = vmatprep.subr.mxu0 0.0
    %1105 = vmatpush1.msra.mxu0 0.0
    %1106 = vmatprep.subr.mxu0 0.0
    %1107 = vmatpush1.msra.mxu0 0.0
    %1108 = vmatprep.subr.mxu0 0.0
    %1109 = vmatpush1.msra.mxu0 0.0
    %1110 = vmatprep.subr.mxu0 0.0
    %1111 = vmatpush1.msra.mxu0 0.0
    %1112 = vmatprep.subr.mxu0 0.0
    %1113 = vmatpush1.msra.mxu0 0.0
    %1114 = vmatprep.subr.mxu0 0.0
    %1115 = vmatpush1.msra.mxu0 0.0
    %1116 = vmatprep.mubr.f32.mxu0 0.0
    %1117 = vmatmul.mubr.f32.gmra.mrb[0].mxu0 %v1029
    %v1118 = vpop.f32.mrb[0].mxu0
    %v1119 = vadd.f32 %v1026, %v1118
    %v1120 = vpop.f32.mrb[0].mxu0
    %1121 = vmatprep.mubr.f32.mxu0 0.0
    %1122 = vmatmul.mubr.f32.gmra.mrb[0].mxu0 %v1032
    %v1123 = vpop.f32.mrb[0].mxu0
    %v1124 = vadd.f32 %v1026, %v1123
    %v1125 = vpop.f32.mrb[0].mxu0
    %1126 = vmatprep.mubr.f32.mxu0 0.0
    %1127 = vmatmul.mubr.f32.gmra.mrb[0].mxu0 %v1035
    %v1128 = vpop.f32.mrb[0].mxu0
    %v1129 = vadd.f32 %v1026, %v1128
    %v1130 = vpop.f32.mrb[0].mxu0
    %1131 = vmatprep.mubr.f32.mxu0 0.0
    %1132 = vmatmul.mubr.f32.gmra.mrb[0].mxu0 %v1038
    %v1133 = vpop.f32.mrb[0].mxu0
    %v1134 = vadd.f32 %v1026, %v1133
    %v1135 = vpop.f32.mrb[0].mxu0
    %1136 = vmatprep.mubr.f32.mxu0 0.0
    %1137 = vmatmul.mubr.f32.gmra.mrb[0].mxu0 %v1041
    %v1138 = vpop.f32.mrb[0].mxu0
    %v1139 = vadd.f32 %v1026, %v1138
    %v1140 = vpop.f32.mrb[0].mxu0
    %1141 = vmatprep.mubr.f32.mxu0 0.0
    %1142 = vmatmul.mubr.f32.gmra.mrb[0].mxu0 %v1044
    %v1143 = vpop.f32.mrb[0].mxu0
    %v1144 = vadd.f32 %v1026, %v1143
    %v1145 = vpop.f32.mrb[0].mxu0
    %1146 = vmatprep.mubr.f32.mxu0 0.0
    %1147 = vmatmul.mubr.f32.gmra.mrb[0].mxu0 %v1047
    %v1148 = vpop.f32.mrb[0].mxu0
    %v1149 = vadd.f32 %v1026, %v1148
    %v1150 = vpop.f32.mrb[0].mxu0
    %1151 = vmatprep.mubr.f32.mxu0 0.0
    %1152 = vmatmul.mubr.f32.gmra.mrb[0].mxu0 %v1050
    %v1153 = vpop.f32.mrb[0].mxu0
    %v1154 = vadd.f32 %v1026, %v1153
    %v1155 = vpop.f32.mrb[0].mxu0
    %1156 = vdwg.mxu0
    %1157 = vmatprep.subr.mxu0 0.0
    %1158 = vmatpush1.msra.mxu0 %v1009
    %1159 = vmatprep.subr.mxu0 0.0
    %1160 = vmatpush1.msra.mxu0 %v1010
    %1161 = vmatprep.subr.mxu0 0.0
    %1162 = vmatpush1.msra.mxu0 %v1011
    %1163 = vmatprep.subr.mxu0 0.0
    %1164 = vmatpush1.msra.mxu0 %v1012
    %1165 = vmatprep.subr.mxu0 0.0
    %1166 = vmatpush1.msra.mxu0 0.0
    %1167 = vmatprep.subr.mxu0 0.0
    %1168 = vmatpush1.msra.mxu0 0.0
    %1169 = vmatprep.subr.mxu0 0.0
    %1170 = vmatpush1.msra.mxu0 0.0
    %1171 = vmatprep.subr.mxu0 0.0
    %1172 = vmatpush1.msra.mxu0 0.0
    %1173 = vmatprep.subr.mxu0 0.0
    %1174 = vmatpush1.msra.mxu0 0.0
    %1175 = vmatprep.subr.mxu0 0.0
    %1176 = vmatpush1.msra.mxu0 0.0
    %1177 = vmatprep.subr.mxu0 0.0
    %1178 = vmatpush1.msra.mxu0 0.0
    %1179 = vmatprep.subr.mxu0 0.0
    %1180 = vmatpush1.msra.mxu0 0.0
    %1181 = vmatprep.subr.mxu0 0.0
    %1182 = vmatpush1.msra.mxu0 0.0
    %1183 = vmatprep.subr.mxu0 0.0
    %1184 = vmatpush1.msra.mxu0 0.0
    %1185 = vmatprep.subr.mxu0 0.0
    %1186 = vmatpush1.msra.mxu0 0.0
    %1187 = vmatprep.subr.mxu0 0.0
    %1188 = vmatpush1.msra.mxu0 0.0
    %1189 = vmatprep.subr.mxu0 0.0
    %1190 = vmatpush1.msra.mxu0 0.0
    %1191 = vmatprep.subr.mxu0 0.0
    %1192 = vmatpush1.msra.mxu0 0.0
    %1193 = vmatprep.subr.mxu0 0.0
    %1194 = vmatpush1.msra.mxu0 0.0
    %1195 = vmatprep.subr.mxu0 0.0
    %1196 = vmatpush1.msra.mxu0 0.0
    %1197 = vmatprep.subr.mxu0 0.0
    %1198 = vmatpush1.msra.mxu0 0.0
    %1199 = vmatprep.subr.mxu0 0.0
    %1200 = vmatpush1.msra.mxu0 0.0
    %1201 = vmatprep.subr.mxu0 0.0
    %1202 = vmatpush1.msra.mxu0 0.0
    %1203 = vmatprep.subr.mxu0 0.0
    %1204 = vmatpush1.msra.mxu0 0.0
    %1205 = vmatprep.subr.mxu0 0.0
    %1206 = vmatpush1.msra.mxu0 0.0
    %1207 = vmatprep.subr.mxu0 0.0
    %1208 = vmatpush1.msra.mxu0 0.0
    %1209 = vmatprep.subr.mxu0 0.0
    %1210 = vmatpush1.msra.mxu0 0.0
    %1211 = vmatprep.subr.mxu0 0.0
    %1212 = vmatpush1.msra.mxu0 0.0
    %1213 = vmatprep.subr.mxu0 0.0
    %1214 = vmatpush1.msra.mxu0 0.0
    %1215 = vmatprep.subr.mxu0 0.0
    %1216 = vmatpush1.msra.mxu0 0.0
    %1217 = vmatprep.subr.mxu0 0.0
    %1218 = vmatpush1.msra.mxu0 0.0
    %1219 = vmatprep.subr.mxu0 0.0
    %1220 = vmatpush1.msra.mxu0 0.0
    %1221 = vmatprep.mubr.f32.mxu0 0.0
    %1222 = vmatmul.mubr.f32.gmra.mrb[0].mxu0 %v183
    %v1223 = vpop.f32.mrb[0].mxu0
    %v1224 = vadd.f32 0.0, %v1223
    %v1225 = vpop.f32.mrb[0].mxu0
    %1226 = vdwg.mxu0
    %v1227 = vadd.f32 %v1119, %v1224
    %v1228 = vxor.u32 %v1227, 2147483648
    %v1229 = vmul.f32 %v1228, 1.442695
    %v1230 = vpow.pop %v1229
    %v1231 = vadd.f32 %v1230, 1.0
    %v1232 = vrcp.pop %v1231
    %v1233 = vmul.f32 1.0, %v1232
    %v1234 = vtanh.pop %v1227
    %v1235 = vmul.f32 %v1233, 0.0
    %1237 = vrot.lane.b32.xlu0 %v1234, 64
    %v1238 = vpop.permute.xlu0 %1237
    %v1240 = vmul.f32 %v1233, %v1238
    %1242 = vrot.lane.b32.xlu0 %v1240, 32
    %v1243 = vpop.permute.xlu0 %1242
    %v1245 = vadd.f32 %v1235, %v1243
    %v1246 = vtanh.pop %v1245
    %1248 = vrot.lane.b32.xlu0 %v1246, 64
    %v1249 = vpop.permute.xlu0 %1248
    %v1251 = vmul.f32 %v1233, %v1249
    %1253 = vrot.lane.b32.xlu0 %v1251, 32
    %v1254 = vpop.permute.xlu0 %1253
    %v1255 = vsel %vm181, %v1254, 0
    %1257 = vmatprep.subr.mxu0 0.0
    %1258 = vmatpush1.msra.mxu0 %v1009
    %1259 = vmatprep.subr.mxu0 0.0
    %1260 = vmatpush1.msra.mxu0 %v1010
    %1261 = vmatprep.subr.mxu0 0.0
    %1262 = vmatpush1.msra.mxu0 %v1011
    %1263 = vmatprep.subr.mxu0 0.0
    %1264 = vmatpush1.msra.mxu0 %v1012
    %1265 = vmatprep.subr.mxu0 0.0
    %1266 = vmatpush1.msra.mxu0 0.0
    %1267 = vmatprep.subr.mxu0 0.0
    %1268 = vmatpush1.msra.mxu0 0.0
    %1269 = vmatprep.subr.mxu0 0.0
    %1270 = vmatpush1.msra.mxu0 0.0
    %1271 = vmatprep.subr.mxu0 0.0
    %1272 = vmatpush1.msra.mxu0 0.0
    %1273 = vmatprep.subr.mxu0 0.0
    %1274 = vmatpush1.msra.mxu0 0.0
    %1275 = vmatprep.subr.mxu0 0.0
    %1276 = vmatpush1.msra.mxu0 0.0
    %1277 = vmatprep.subr.mxu0 0.0
    %1278 = vmatpush1.msra.mxu0 0.0
    %1279 = vmatprep.subr.mxu0 0.0
    %1280 = vmatpush1.msra.mxu0 0.0
    %1281 = vmatprep.subr.mxu0 0.0
    %1282 = vmatpush1.msra.mxu0 0.0
    %1283 = vmatprep.subr.mxu0 0.0
    %1284 = vmatpush1.msra.mxu0 0.0
    %1285 = vmatprep.subr.mxu0 0.0
    %1286 = vmatpush1.msra.mxu0 0.0
    %1287 = vmatprep.subr.mxu0 0.0
    %1288 = vmatpush1.msra.mxu0 0.0
    %1289 = vmatprep.subr.mxu0 0.0
    %1290 = vmatpush1.msra.mxu0 0.0
    %1291 = vmatprep.subr.mxu0 0.0
    %1292 = vmatpush1.msra.mxu0 0.0
    %1293 = vmatprep.subr.mxu0 0.0
    %1294 = vmatpush1.msra.mxu0 0.0
    %1295 = vmatprep.subr.mxu0 0.0
    %1296 = vmatpush1.msra.mxu0 0.0
    %1297 = vmatprep.subr.mxu0 0.0
    %1298 = vmatpush1.msra.mxu0 0.0
    %1299 = vmatprep.subr.mxu0 0.0
    %1300 = vmatpush1.msra.mxu0 0.0
    %1301 = vmatprep.subr.mxu0 0.0
    %1302 = vmatpush1.msra.mxu0 0.0
    %1303 = vmatprep.subr.mxu0 0.0
    %1304 = vmatpush1.msra.mxu0 0.0
    %1305 = vmatprep.subr.mxu0 0.0
    %1306 = vmatpush1.msra.mxu0 0.0
    %1307 = vmatprep.subr.mxu0 0.0
    %1308 = vmatpush1.msra.mxu0 0.0
    %1309 = vmatprep.subr.mxu0 0.0
    %1310 = vmatpush1.msra.mxu0 0.0
    %1311 = vmatprep.subr.mxu0 0.0
    %1312 = vmatpush1.msra.mxu0 0.0
    %1313 = vmatprep.subr.mxu0 0.0
    %1314 = vmatpush1.msra.mxu0 0.0
    %1315 = vmatprep.subr.mxu0 0.0
    %1316 = vmatpush1.msra.mxu0 0.0
    %1317 = vmatprep.subr.mxu0 0.0
    %1318 = vmatpush1.msra.mxu0 0.0
    %1319 = vmatprep.subr.mxu0 0.0
    %1320 = vmatpush1.msra.mxu0 0.0
    %1321 = vmatprep.mubr.f32.mxu0 0.0
    %1322 = vmatmul.mubr.f32.gmra.mrb[0].mxu0 %v1255
    %v1323 = vpop.f32.mrb[0].mxu0
    %v1324 = vadd.f32 0.0, %v1323
    %v1325 = vpop.f32.mrb[0].mxu0
    %1326 = vdwg.mxu0
    %v1327 = vadd.f32 %v1124, %v1324
    %v1328 = vxor.u32 %v1327, 2147483648
    %v1329 = vmul.f32 %v1328, 1.442695
    %v1330 = vpow.pop %v1329
    %v1331 = vadd.f32 %v1330, 1.0
    %v1332 = vrcp.pop %v1331
    %v1333 = vmul.f32 1.0, %v1332
    %v1334 = vtanh.pop %v1327
    %v1335 = vmul.f32 %v1333, %v1245
    %1337 = vrot.lane.b32.xlu0 %v1334, 64
    %v1338 = vpop.permute.xlu0 %1337
    %v1340 = vmul.f32 %v1333, %v1338
    %1342 = vrot.lane.b32.xlu0 %v1340, 32
    %v1343 = vpop.permute.xlu0 %1342
    %v1345 = vadd.f32 %v1335, %v1343
    %v1346 = vtanh.pop %v1345
    %1348 = vrot.lane.b32.xlu0 %v1346, 64
    %v1349 = vpop.permute.xlu0 %1348
    %v1351 = vmul.f32 %v1333, %v1349
    %1353 = vrot.lane.b32.xlu0 %v1351, 32
    %v1354 = vpop.permute.xlu0 %1353
    %v1355 = vsel %vm181, %v1354, 0
    %1357 = vmatprep.subr.mxu0 0.0
    %1358 = vmatpush1.msra.mxu0 %v1009
    %1359 = vmatprep.subr.mxu0 0.0
    %1360 = vmatpush1.msra.mxu0 %v1010
    %1361 = vmatprep.subr.mxu0 0.0
    %1362 = vmatpush1.msra.mxu0 %v1011
    %1363 = vmatprep.subr.mxu0 0.0
    %1364 = vmatpush1.msra.mxu0 %v1012
    %1365 = vmatprep.subr.mxu0 0.0
    %1366 = vmatpush1.msra.mxu0 0.0
    %1367 = vmatprep.subr.mxu0 0.0
    %1368 = vmatpush1.msra.mxu0 0.0
    %1369 = vmatprep.subr.mxu0 0.0
    %1370 = vmatpush1.msra.mxu0 0.0
    %1371 = vmatprep.subr.mxu0 0.0
    %1372 = vmatpush1.msra.mxu0 0.0
    %1373 = vmatprep.subr.mxu0 0.0
    %1374 = vmatpush1.msra.mxu0 0.0
    %1375 = vmatprep.subr.mxu0 0.0
    %1376 = vmatpush1.msra.mxu0 0.0
    %1377 = vmatprep.subr.mxu0 0.0
    %1378 = vmatpush1.msra.mxu0 0.0
    %1379 = vmatprep.subr.mxu0 0.0
    %1380 = vmatpush1.msra.mxu0 0.0
    %1381 = vmatprep.subr.mxu0 0.0
    %1382 = vmatpush1.msra.mxu0 0.0
    %1383 = vmatprep.subr.mxu0 0.0
    %1384 = vmatpush1.msra.mxu0 0.0
    %1385 = vmatprep.subr.mxu0 0.0
    %1386 = vmatpush1.msra.mxu0 0.0
    %1387 = vmatprep.subr.mxu0 0.0
    %1388 = vmatpush1.msra.mxu0 0.0
    %1389 = vmatprep.subr.mxu0 0.0
    %1390 = vmatpush1.msra.mxu0 0.0
    %1391 = vmatprep.subr.mxu0 0.0
    %1392 = vmatpush1.msra.mxu0 0.0
    %1393 = vmatprep.subr.mxu0 0.0
    %1394 = vmatpush1.msra.mxu0 0.0
    %1395 = vmatprep.subr.mxu0 0.0
    %1396 = vmatpush1.msra.mxu0 0.0
    %1397 = vmatprep.subr.mxu0 0.0
    %1398 = vmatpush1.msra.mxu0 0.0
    %1399 = vmatprep.subr.mxu0 0.0
    %1400 = vmatpush1.msra.mxu0 0.0
    %1401 = vmatprep.subr.mxu0 0.0
    %1402 = vmatpush1.msra.mxu0 0.0
    %1403 = vmatprep.subr.mxu0 0.0
    %1404 = vmatpush1.msra.mxu0 0.0
    %1405 = vmatprep.subr.mxu0 0.0
    %1406 = vmatpush1.msra.mxu0 0.0
    %1407 = vmatprep.subr.mxu0 0.0
    %1408 = vmatpush1.msra.mxu0 0.0
    %1409 = vmatprep.subr.mxu0 0.0
    %1410 = vmatpush1.msra.mxu0 0.0
    %1411 = vmatprep.subr.mxu0 0.0
    %1412 = vmatpush1.msra.mxu0 0.0
    %1413 = vmatprep.subr.mxu0 0.0
    %1414 = vmatpush1.msra.mxu0 0.0
    %1415 = vmatprep.subr.mxu0 0.0
    %1416 = vmatpush1.msra.mxu0 0.0
    %1417 = vmatprep.subr.mxu0 0.0
    %1418 = vmatpush1.msra.mxu0 0.0
    %1419 = vmatprep.subr.mxu0 0.0
    %1420 = vmatpush1.msra.mxu0 0.0
    %1421 = vmatprep.mubr.f32.mxu0 0.0
    %1422 = vmatmul.mubr.f32.gmra.mrb[0].mxu0 %v1355
    %v1423 = vpop.f32.mrb[0].mxu0
    %v1424 = vadd.f32 0.0, %v1423
    %v1425 = vpop.f32.mrb[0].mxu0
    %1426 = vdwg.mxu0
    %v1427 = vadd.f32 %v1129, %v1424
    %v1428 = vxor.u32 %v1427, 2147483648
    %v1429 = vmul.f32 %v1428, 1.442695
    %v1430 = vpow.pop %v1429
    %v1431 = vadd.f32 %v1430, 1.0
    %v1432 = vrcp.pop %v1431
    %v1433 = vmul.f32 1.0, %v1432
    %v1434 = vtanh.pop %v1427
    %v1435 = vmul.f32 %v1433, %v1345
    %1437 = vrot.lane.b32.xlu0 %v1434, 64
    %v1438 = vpop.permute.xlu0 %1437
    %v1440 = vmul.f32 %v1433, %v1438
    %1442 = vrot.lane.b32.xlu0 %v1440, 32
    %v1443 = vpop.permute.xlu0 %1442
    %v1445 = vadd.f32 %v1435, %v1443
    %v1446 = vtanh.pop %v1445
    %1448 = vrot.lane.b32.xlu0 %v1446, 64
    %v1449 = vpop.permute.xlu0 %1448
    %v1451 = vmul.f32 %v1433, %v1449
    %1453 = vrot.lane.b32.xlu0 %v1451, 32
    %v1454 = vpop.permute.xlu0 %1453
    %v1455 = vsel %vm181, %v1454, 0
    %1457 = vmatprep.subr.mxu0 0.0
    %1458 = vmatpush1.msra.mxu0 %v1009
    %1459 = vmatprep.subr.mxu0 0.0
    %1460 = vmatpush1.msra.mxu0 %v1010
    %1461 = vmatprep.subr.mxu0 0.0
    %1462 = vmatpush1.msra.mxu0 %v1011
    %1463 = vmatprep.subr.mxu0 0.0
    %1464 = vmatpush1.msra.mxu0 %v1012
    %1465 = vmatprep.subr.mxu0 0.0
    %1466 = vmatpush1.msra.mxu0 0.0
    %1467 = vmatprep.subr.mxu0 0.0
    %1468 = vmatpush1.msra.mxu0 0.0
    %1469 = vmatprep.subr.mxu0 0.0
    %1470 = vmatpush1.msra.mxu0 0.0
    %1471 = vmatprep.subr.mxu0 0.0
    %1472 = vmatpush1.msra.mxu0 0.0
    %1473 = vmatprep.subr.mxu0 0.0
    %1474 = vmatpush1.msra.mxu0 0.0
    %1475 = vmatprep.subr.mxu0 0.0
    %1476 = vmatpush1.msra.mxu0 0.0
    %1477 = vmatprep.subr.mxu0 0.0
    %1478 = vmatpush1.msra.mxu0 0.0
    %1479 = vmatprep.subr.mxu0 0.0
    %1480 = vmatpush1.msra.mxu0 0.0
    %1481 = vmatprep.subr.mxu0 0.0
    %1482 = vmatpush1.msra.mxu0 0.0
    %1483 = vmatprep.subr.mxu0 0.0
    %1484 = vmatpush1.msra.mxu0 0.0
    %1485 = vmatprep.subr.mxu0 0.0
    %1486 = vmatpush1.msra.mxu0 0.0
    %1487 = vmatprep.subr.mxu0 0.0
    %1488 = vmatpush1.msra.mxu0 0.0
    %1489 = vmatprep.subr.mxu0 0.0
    %1490 = vmatpush1.msra.mxu0 0.0
    %1491 = vmatprep.subr.mxu0 0.0
    %1492 = vmatpush1.msra.mxu0 0.0
    %1493 = vmatprep.subr.mxu0 0.0
    %1494 = vmatpush1.msra.mxu0 0.0
    %1495 = vmatprep.subr.mxu0 0.0
    %1496 = vmatpush1.msra.mxu0 0.0
    %1497 = vmatprep.subr.mxu0 0.0
    %1498 = vmatpush1.msra.mxu0 0.0
    %1499 = vmatprep.subr.mxu0 0.0
    %1500 = vmatpush1.msra.mxu0 0.0
    %1501 = vmatprep.subr.mxu0 0.0
    %1502 = vmatpush1.msra.mxu0 0.0
    %1503 = vmatprep.subr.mxu0 0.0
    %1504 = vmatpush1.msra.mxu0 0.0
    %1505 = vmatprep.subr.mxu0 0.0
    %1506 = vmatpush1.msra.mxu0 0.0
    %1507 = vmatprep.subr.mxu0 0.0
    %1508 = vmatpush1.msra.mxu0 0.0
    %1509 = vmatprep.subr.mxu0 0.0
    %1510 = vmatpush1.msra.mxu0 0.0
    %1511 = vmatprep.subr.mxu0 0.0
    %1512 = vmatpush1.msra.mxu0 0.0
    %1513 = vmatprep.subr.mxu0 0.0
    %1514 = vmatpush1.msra.mxu0 0.0
    %1515 = vmatprep.subr.mxu0 0.0
    %1516 = vmatpush1.msra.mxu0 0.0
    %1517 = vmatprep.subr.mxu0 0.0
    %1518 = vmatpush1.msra.mxu0 0.0
    %1519 = vmatprep.subr.mxu0 0.0
    %1520 = vmatpush1.msra.mxu0 0.0
    %1521 = vmatprep.mubr.f32.mxu0 0.0
    %1522 = vmatmul.mubr.f32.gmra.mrb[0].mxu0 %v1455
    %v1523 = vpop.f32.mrb[0].mxu0
    %v1524 = vadd.f32 0.0, %v1523
    %v1525 = vpop.f32.mrb[0].mxu0
    %1526 = vdwg.mxu0
    %v1527 = vadd.f32 %v1134, %v1524
    %v1528 = vxor.u32 %v1527, 2147483648
    %v1529 = vmul.f32 %v1528, 1.442695
    %v1530 = vpow.pop %v1529
    %v1531 = vadd.f32 %v1530, 1.0
    %v1532 = vrcp.pop %v1531
    %v1533 = vmul.f32 1.0, %v1532
    %v1534 = vtanh.pop %v1527
    %v1535 = vmul.f32 %v1533, %v1445
    %1537 = vrot.lane.b32.xlu0 %v1534, 64
    %v1538 = vpop.permute.xlu0 %1537
    %v1540 = vmul.f32 %v1533, %v1538
    %1542 = vrot.lane.b32.xlu0 %v1540, 32
    %v1543 = vpop.permute.xlu0 %1542
    %v1545 = vadd.f32 %v1535, %v1543
    %v1546 = vtanh.pop %v1545
    %1548 = vrot.lane.b32.xlu0 %v1546, 64
    %v1549 = vpop.permute.xlu0 %1548
    %v1551 = vmul.f32 %v1533, %v1549
    %1553 = vrot.lane.b32.xlu0 %v1551, 32
    %v1554 = vpop.permute.xlu0 %1553
    %v1555 = vsel %vm181, %v1554, 0
    %1557 = vmatprep.subr.mxu0 0.0
    %1558 = vmatpush1.msra.mxu0 %v1009
    %1559 = vmatprep.subr.mxu0 0.0
    %1560 = vmatpush1.msra.mxu0 %v1010
    %1561 = vmatprep.subr.mxu0 0.0
    %1562 = vmatpush1.msra.mxu0 %v1011
    %1563 = vmatprep.subr.mxu0 0.0
    %1564 = vmatpush1.msra.mxu0 %v1012
    %1565 = vmatprep.subr.mxu0 0.0
    %1566 = vmatpush1.msra.mxu0 0.0
    %1567 = vmatprep.subr.mxu0 0.0
    %1568 = vmatpush1.msra.mxu0 0.0
    %1569 = vmatprep.subr.mxu0 0.0
    %1570 = vmatpush1.msra.mxu0 0.0
    %1571 = vmatprep.subr.mxu0 0.0
    %1572 = vmatpush1.msra.mxu0 0.0
    %1573 = vmatprep.subr.mxu0 0.0
    %1574 = vmatpush1.msra.mxu0 0.0
    %1575 = vmatprep.subr.mxu0 0.0
    %1576 = vmatpush1.msra.mxu0 0.0
    %1577 = vmatprep.subr.mxu0 0.0
    %1578 = vmatpush1.msra.mxu0 0.0
    %1579 = vmatprep.subr.mxu0 0.0
    %1580 = vmatpush1.msra.mxu0 0.0
    %1581 = vmatprep.subr.mxu0 0.0
    %1582 = vmatpush1.msra.mxu0 0.0
    %1583 = vmatprep.subr.mxu0 0.0
    %1584 = vmatpush1.msra.mxu0 0.0
    %1585 = vmatprep.subr.mxu0 0.0
    %1586 = vmatpush1.msra.mxu0 0.0
    %1587 = vmatprep.subr.mxu0 0.0
    %1588 = vmatpush1.msra.mxu0 0.0
    %1589 = vmatprep.subr.mxu0 0.0
    %1590 = vmatpush1.msra.mxu0 0.0
    %1591 = vmatprep.subr.mxu0 0.0
    %1592 = vmatpush1.msra.mxu0 0.0
    %1593 = vmatprep.subr.mxu0 0.0
    %1594 = vmatpush1.msra.mxu0 0.0
    %1595 = vmatprep.subr.mxu0 0.0
    %1596 = vmatpush1.msra.mxu0 0.0
    %1597 = vmatprep.subr.mxu0 0.0
    %1598 = vmatpush1.msra.mxu0 0.0
    %1599 = vmatprep.subr.mxu0 0.0
    %1600 = vmatpush1.msra.mxu0 0.0
    %1601 = vmatprep.subr.mxu0 0.0
    %1602 = vmatpush1.msra.mxu0 0.0
    %1603 = vmatprep.subr.mxu0 0.0
    %1604 = vmatpush1.msra.mxu0 0.0
    %1605 = vmatprep.subr.mxu0 0.0
    %1606 = vmatpush1.msra.mxu0 0.0
    %1607 = vmatprep.subr.mxu0 0.0
    %1608 = vmatpush1.msra.mxu0 0.0
    %1609 = vmatprep.subr.mxu0 0.0
    %1610 = vmatpush1.msra.mxu0 0.0
    %1611 = vmatprep.subr.mxu0 0.0
    %1612 = vmatpush1.msra.mxu0 0.0
    %1613 = vmatprep.subr.mxu0 0.0
    %1614 = vmatpush1.msra.mxu0 0.0
    %1615 = vmatprep.subr.mxu0 0.0
    %1616 = vmatpush1.msra.mxu0 0.0
    %1617 = vmatprep.subr.mxu0 0.0
    %1618 = vmatpush1.msra.mxu0 0.0
    %1619 = vmatprep.subr.mxu0 0.0
    %1620 = vmatpush1.msra.mxu0 0.0
    %1621 = vmatprep.mubr.f32.mxu0 0.0
    %1622 = vmatmul.mubr.f32.gmra.mrb[0].mxu0 %v1555
    %v1623 = vpop.f32.mrb[0].mxu0
    %v1624 = vadd.f32 0.0, %v1623
    %v1625 = vpop.f32.mrb[0].mxu0
    %1626 = vdwg.mxu0
    %v1627 = vadd.f32 %v1139, %v1624
    %v1628 = vxor.u32 %v1627, 2147483648
    %v1629 = vmul.f32 %v1628, 1.442695
    %v1630 = vpow.pop %v1629
    %v1631 = vadd.f32 %v1630, 1.0
    %v1632 = vrcp.pop %v1631
    %v1633 = vmul.f32 1.0, %v1632
    %v1634 = vtanh.pop %v1627
    %v1635 = vmul.f32 %v1633, %v1545
    %1637 = vrot.lane.b32.xlu0 %v1634, 64
    %v1638 = vpop.permute.xlu0 %1637
    %v1640 = vmul.f32 %v1633, %v1638
    %1642 = vrot.lane.b32.xlu0 %v1640, 32
    %v1643 = vpop.permute.xlu0 %1642
    %v1645 = vadd.f32 %v1635, %v1643
    %v1646 = vtanh.pop %v1645
    %1648 = vrot.lane.b32.xlu0 %v1646, 64
    %v1649 = vpop.permute.xlu0 %1648
    %v1651 = vmul.f32 %v1633, %v1649
    %1653 = vrot.lane.b32.xlu0 %v1651, 32
    %v1654 = vpop.permute.xlu0 %1653
    %v1655 = vsel %vm181, %v1654, 0
    %1657 = vmatprep.subr.mxu0 0.0
    %1658 = vmatpush1.msra.mxu0 %v1009
    %1659 = vmatprep.subr.mxu0 0.0
    %1660 = vmatpush1.msra.mxu0 %v1010
    %1661 = vmatprep.subr.mxu0 0.0
    %1662 = vmatpush1.msra.mxu0 %v1011
    %1663 = vmatprep.subr.mxu0 0.0
    %1664 = vmatpush1.msra.mxu0 %v1012
    %1665 = vmatprep.subr.mxu0 0.0
    %1666 = vmatpush1.msra.mxu0 0.0
    %1667 = vmatprep.subr.mxu0 0.0
    %1668 = vmatpush1.msra.mxu0 0.0
    %1669 = vmatprep.subr.mxu0 0.0
    %1670 = vmatpush1.msra.mxu0 0.0
    %1671 = vmatprep.subr.mxu0 0.0
    %1672 = vmatpush1.msra.mxu0 0.0
    %1673 = vmatprep.subr.mxu0 0.0
    %1674 = vmatpush1.msra.mxu0 0.0
    %1675 = vmatprep.subr.mxu0 0.0
    %1676 = vmatpush1.msra.mxu0 0.0
    %1677 = vmatprep.subr.mxu0 0.0
    %1678 = vmatpush1.msra.mxu0 0.0
    %1679 = vmatprep.subr.mxu0 0.0
    %1680 = vmatpush1.msra.mxu0 0.0
    %1681 = vmatprep.subr.mxu0 0.0
    %1682 = vmatpush1.msra.mxu0 0.0
    %1683 = vmatprep.subr.mxu0 0.0
    %1684 = vmatpush1.msra.mxu0 0.0
    %1685 = vmatprep.subr.mxu0 0.0
    %1686 = vmatpush1.msra.mxu0 0.0
    %1687 = vmatprep.subr.mxu0 0.0
    %1688 = vmatpush1.msra.mxu0 0.0
    %1689 = vmatprep.subr.mxu0 0.0
    %1690 = vmatpush1.msra.mxu0 0.0
    %1691 = vmatprep.subr.mxu0 0.0
    %1692 = vmatpush1.msra.mxu0 0.0
    %1693 = vmatprep.subr.mxu0 0.0
    %1694 = vmatpush1.msra.mxu0 0.0
    %1695 = vmatprep.subr.mxu0 0.0
    %1696 = vmatpush1.msra.mxu0 0.0
    %1697 = vmatprep.subr.mxu0 0.0
    %1698 = vmatpush1.msra.mxu0 0.0
    %1699 = vmatprep.subr.mxu0 0.0
    %1700 = vmatpush1.msra.mxu0 0.0
    %1701 = vmatprep.subr.mxu0 0.0
    %1702 = vmatpush1.msra.mxu0 0.0
    %1703 = vmatprep.subr.mxu0 0.0
    %1704 = vmatpush1.msra.mxu0 0.0
    %1705 = vmatprep.subr.mxu0 0.0
    %1706 = vmatpush1.msra.mxu0 0.0
    %1707 = vmatprep.subr.mxu0 0.0
    %1708 = vmatpush1.msra.mxu0 0.0
    %1709 = vmatprep.subr.mxu0 0.0
    %1710 = vmatpush1.msra.mxu0 0.0
    %1711 = vmatprep.subr.mxu0 0.0
    %1712 = vmatpush1.msra.mxu0 0.0
    %1713 = vmatprep.subr.mxu0 0.0
    %1714 = vmatpush1.msra.mxu0 0.0
    %1715 = vmatprep.subr.mxu0 0.0
    %1716 = vmatpush1.msra.mxu0 0.0
    %1717 = vmatprep.subr.mxu0 0.0
    %1718 = vmatpush1.msra.mxu0 0.0
    %1719 = vmatprep.subr.mxu0 0.0
    %1720 = vmatpush1.msra.mxu0 0.0
    %1721 = vmatprep.mubr.f32.mxu0 0.0
    %1722 = vmatmul.mubr.f32.gmra.mrb[0].mxu0 %v1655
    %v1723 = vpop.f32.mrb[0].mxu0
    %v1724 = vadd.f32 0.0, %v1723
    %v1725 = vpop.f32.mrb[0].mxu0
    %1726 = vdwg.mxu0
    %v1727 = vadd.f32 %v1144, %v1724
    %v1728 = vxor.u32 %v1727, 2147483648
    %v1729 = vmul.f32 %v1728, 1.442695
    %v1730 = vpow.pop %v1729
    %v1731 = vadd.f32 %v1730, 1.0
    %v1732 = vrcp.pop %v1731
    %v1733 = vmul.f32 1.0, %v1732
    %v1734 = vtanh.pop %v1727
    %v1735 = vmul.f32 %v1733, %v1645
    %1737 = vrot.lane.b32.xlu0 %v1734, 64
    %v1738 = vpop.permute.xlu0 %1737
    %v1740 = vmul.f32 %v1733, %v1738
    %1742 = vrot.lane.b32.xlu0 %v1740, 32
    %v1743 = vpop.permute.xlu0 %1742
    %v1745 = vadd.f32 %v1735, %v1743
    %v1746 = vtanh.pop %v1745
    %1748 = vrot.lane.b32.xlu0 %v1746, 64
    %v1749 = vpop.permute.xlu0 %1748
    %v1751 = vmul.f32 %v1733, %v1749
    %1753 = vrot.lane.b32.xlu0 %v1751, 32
    %v1754 = vpop.permute.xlu0 %1753
    %v1755 = vsel %vm181, %v1754, 0
    %1757 = vmatprep.subr.mxu0 0.0
    %1758 = vmatpush1.msra.mxu0 %v1009
    %1759 = vmatprep.subr.mxu0 0.0
    %1760 = vmatpush1.msra.mxu0 %v1010
    %1761 = vmatprep.subr.mxu0 0.0
    %1762 = vmatpush1.msra.mxu0 %v1011
    %1763 = vmatprep.subr.mxu0 0.0
    %1764 = vmatpush1.msra.mxu0 %v1012
    %1765 = vmatprep.subr.mxu0 0.0
    %1766 = vmatpush1.msra.mxu0 0.0
    %1767 = vmatprep.subr.mxu0 0.0
    %1768 = vmatpush1.msra.mxu0 0.0
    %1769 = vmatprep.subr.mxu0 0.0
    %1770 = vmatpush1.msra.mxu0 0.0
    %1771 = vmatprep.subr.mxu0 0.0
    %1772 = vmatpush1.msra.mxu0 0.0
    %1773 = vmatprep.subr.mxu0 0.0
    %1774 = vmatpush1.msra.mxu0 0.0
    %1775 = vmatprep.subr.mxu0 0.0
    %1776 = vmatpush1.msra.mxu0 0.0
    %1777 = vmatprep.subr.mxu0 0.0
    %1778 = vmatpush1.msra.mxu0 0.0
    %1779 = vmatprep.subr.mxu0 0.0
    %1780 = vmatpush1.msra.mxu0 0.0
    %1781 = vmatprep.subr.mxu0 0.0
    %1782 = vmatpush1.msra.mxu0 0.0
    %1783 = vmatprep.subr.mxu0 0.0
    %1784 = vmatpush1.msra.mxu0 0.0
    %1785 = vmatprep.subr.mxu0 0.0
    %1786 = vmatpush1.msra.mxu0 0.0
    %1787 = vmatprep.subr.mxu0 0.0
    %1788 = vmatpush1.msra.mxu0 0.0
    %1789 = vmatprep.subr.mxu0 0.0
    %1790 = vmatpush1.msra.mxu0 0.0
    %1791 = vmatprep.subr.mxu0 0.0
    %1792 = vmatpush1.msra.mxu0 0.0
    %1793 = vmatprep.subr.mxu0 0.0
    %1794 = vmatpush1.msra.mxu0 0.0
    %1795 = vmatprep.subr.mxu0 0.0
    %1796 = vmatpush1.msra.mxu0 0.0
    %1797 = vmatprep.subr.mxu0 0.0
    %1798 = vmatpush1.msra.mxu0 0.0
    %1799 = vmatprep.subr.mxu0 0.0
    %1800 = vmatpush1.msra.mxu0 0.0
    %1801 = vmatprep.subr.mxu0 0.0
    %1802 = vmatpush1.msra.mxu0 0.0
    %1803 = vmatprep.subr.mxu0 0.0
    %1804 = vmatpush1.msra.mxu0 0.0
    %1805 = vmatprep.subr.mxu0 0.0
    %1806 = vmatpush1.msra.mxu0 0.0
    %1807 = vmatprep.subr.mxu0 0.0
    %1808 = vmatpush1.msra.mxu0 0.0
    %1809 = vmatprep.subr.mxu0 0.0
    %1810 = vmatpush1.msra.mxu0 0.0
    %1811 = vmatprep.subr.mxu0 0.0
    %1812 = vmatpush1.msra.mxu0 0.0
    %1813 = vmatprep.subr.mxu0 0.0
    %1814 = vmatpush1.msra.mxu0 0.0
    %1815 = vmatprep.subr.mxu0 0.0
    %1816 = vmatpush1.msra.mxu0 0.0
    %1817 = vmatprep.subr.mxu0 0.0
    %1818 = vmatpush1.msra.mxu0 0.0
    %1819 = vmatprep.subr.mxu0 0.0
    %1820 = vmatpush1.msra.mxu0 0.0
    %1821 = vmatprep.mubr.f32.mxu0 0.0
    %1822 = vmatmul.mubr.f32.gmra.mrb[0].mxu0 %v1755
    %v1823 = vpop.f32.mrb[0].mxu0
    %v1824 = vadd.f32 0.0, %v1823
    %v1825 = vpop.f32.mrb[0].mxu0
    %1826 = vdwg.mxu0
    %v1827 = vadd.f32 %v1149, %v1824
    %v1828 = vxor.u32 %v1827, 2147483648
    %v1829 = vmul.f32 %v1828, 1.442695
    %v1830 = vpow.pop %v1829
    %v1831 = vadd.f32 %v1830, 1.0
    %v1832 = vrcp.pop %v1831
    %v1833 = vmul.f32 1.0, %v1832
    %v1834 = vtanh.pop %v1827
    %v1835 = vmul.f32 %v1833, %v1745
    %1837 = vrot.lane.b32.xlu0 %v1834, 64
    %v1838 = vpop.permute.xlu0 %1837
    %v1840 = vmul.f32 %v1833, %v1838
    %1842 = vrot.lane.b32.xlu0 %v1840, 32
    %v1843 = vpop.permute.xlu0 %1842
    %v1845 = vadd.f32 %v1835, %v1843
    %v1846 = vtanh.pop %v1845
    %1848 = vrot.lane.b32.xlu0 %v1846, 64
    %v1849 = vpop.permute.xlu0 %1848
    %v1851 = vmul.f32 %v1833, %v1849
    %1853 = vrot.lane.b32.xlu0 %v1851, 32
    %v1854 = vpop.permute.xlu0 %1853
    %v1855 = vsel %vm181, %v1854, 0
    %1857 = vmatprep.subr.mxu0 0.0
    %1858 = vmatpush1.msra.mxu0 %v1009
    %1859 = vmatprep.subr.mxu0 0.0
    %1860 = vmatpush1.msra.mxu0 %v1010
    %1861 = vmatprep.subr.mxu0 0.0
    %1862 = vmatpush1.msra.mxu0 %v1011
    %1863 = vmatprep.subr.mxu0 0.0
    %1864 = vmatpush1.msra.mxu0 %v1012
    %1865 = vmatprep.subr.mxu0 0.0
    %1866 = vmatpush1.msra.mxu0 0.0
    %1867 = vmatprep.subr.mxu0 0.0
    %1868 = vmatpush1.msra.mxu0 0.0
    %1869 = vmatprep.subr.mxu0 0.0
    %1870 = vmatpush1.msra.mxu0 0.0
    %1871 = vmatprep.subr.mxu0 0.0
    %1872 = vmatpush1.msra.mxu0 0.0
    %1873 = vmatprep.subr.mxu0 0.0
    %1874 = vmatpush1.msra.mxu0 0.0
    %1875 = vmatprep.subr.mxu0 0.0
    %1876 = vmatpush1.msra.mxu0 0.0
    %1877 = vmatprep.subr.mxu0 0.0
    %1878 = vmatpush1.msra.mxu0 0.0
    %1879 = vmatprep.subr.mxu0 0.0
    %1880 = vmatpush1.msra.mxu0 0.0
    %1881 = vmatprep.subr.mxu0 0.0
    %1882 = vmatpush1.msra.mxu0 0.0
    %1883 = vmatprep.subr.mxu0 0.0
    %1884 = vmatpush1.msra.mxu0 0.0
    %1885 = vmatprep.subr.mxu0 0.0
    %1886 = vmatpush1.msra.mxu0 0.0
    %1887 = vmatprep.subr.mxu0 0.0
    %1888 = vmatpush1.msra.mxu0 0.0
    %1889 = vmatprep.subr.mxu0 0.0
    %1890 = vmatpush1.msra.mxu0 0.0
    %1891 = vmatprep.subr.mxu0 0.0
    %1892 = vmatpush1.msra.mxu0 0.0
    %1893 = vmatprep.subr.mxu0 0.0
    %1894 = vmatpush1.msra.mxu0 0.0
    %1895 = vmatprep.subr.mxu0 0.0
    %1896 = vmatpush1.msra.mxu0 0.0
    %1897 = vmatprep.subr.mxu0 0.0
    %1898 = vmatpush1.msra.mxu0 0.0
    %1899 = vmatprep.subr.mxu0 0.0
    %1900 = vmatpush1.msra.mxu0 0.0
    %1901 = vmatprep.subr.mxu0 0.0
    %1902 = vmatpush1.msra.mxu0 0.0
    %1903 = vmatprep.subr.mxu0 0.0
    %1904 = vmatpush1.msra.mxu0 0.0
    %1905 = vmatprep.subr.mxu0 0.0
    %1906 = vmatpush1.msra.mxu0 0.0
    %1907 = vmatprep.subr.mxu0 0.0
    %1908 = vmatpush1.msra.mxu0 0.0
    %1909 = vmatprep.subr.mxu0 0.0
    %1910 = vmatpush1.msra.mxu0 0.0
    %1911 = vmatprep.subr.mxu0 0.0
    %1912 = vmatpush1.msra.mxu0 0.0
    %1913 = vmatprep.subr.mxu0 0.0
    %1914 = vmatpush1.msra.mxu0 0.0
    %1915 = vmatprep.subr.mxu0 0.0
    %1916 = vmatpush1.msra.mxu0 0.0
    %1917 = vmatprep.subr.mxu0 0.0
    %1918 = vmatpush1.msra.mxu0 0.0
    %1919 = vmatprep.subr.mxu0 0.0
    %1920 = vmatpush1.msra.mxu0 0.0
    %1921 = vmatprep.mubr.f32.mxu0 0.0
    %1922 = vmatmul.mubr.f32.gmra.mrb[0].mxu0 %v1855
    %v1923 = vpop.f32.mrb[0].mxu0
    %v1924 = vadd.f32 0.0, %v1923
    %v1925 = vpop.f32.mrb[0].mxu0
    %1926 = vdwg.mxu0
    %v1927 = vadd.f32 %v1154, %v1924
    %v1928 = vxor.u32 %v1927, 2147483648
    %v1929 = vmul.f32 %v1928, 1.442695
    %v1930 = vpow.pop %v1929
    %v1931 = vadd.f32 %v1930, 1.0
    %v1932 = vrcp.pop %v1931
    %v1933 = vmul.f32 1.0, %v1932
    %v1934 = vtanh.pop %v1927
    %v1935 = vmul.f32 %v1933, %v1845
    %1937 = vrot.lane.b32.xlu0 %v1934, 64
    %v1938 = vpop.permute.xlu0 %1937
    %v1940 = vmul.f32 %v1933, %v1938
    %1942 = vrot.lane.b32.xlu0 %v1940, 32
    %v1943 = vpop.permute.xlu0 %1942
    %v1945 = vadd.f32 %v1935, %v1943
    %v1946 = vtanh.pop %v1945
    %1948 = vrot.lane.b32.xlu0 %v1946, 64
    %v1949 = vpop.permute.xlu0 %1948
    %v1951 = vmul.f32 %v1933, %v1949
    %1953 = vrot.lane.b32.xlu0 %v1951, 32
    %v1954 = vpop.permute.xlu0 %1953
    %s1956 = scalar_lea.vmem [#allocation3], 8
    %1957 = vst.msk [vmem:[%s1956] sm:$0xff] %vm181, %v1954
    %1959 = vrot.lane.b32.xlu0 %v1945, 96
    %v1960 = vpop.permute.xlu0 %1959
    %s1962 = scalar_lea.vmem [#allocation5], 8
    %1963 = vst.msk [vmem:[%s1962] sm:$0xff] %vm181, %v1960
    // Predicated region
    $region30: #{encoder_forward.1} parent=1 // pred_check
      _
    $region31: #{encoder_forward.1} parent=1 // pred_check_branch
      %1965 = sbr.rel (0) target = $region33
    $region32: #{encoder_forward.1} parent=1 // pred_region
      %s1967 = ssub.s32 256, 256
      %1968 = vsyncadd [#allocation4], %s1967
      %s1969 = sshll.u32 [#allocation3], 4
      %s1970 = int_to_ptr.vmem [resolvable:$true] %s1969
      %1975 = dma.vmem_to_hbm [thread:$0]  %s1970, 256, %s7, [#allocation4], 128, 128, 8
    $region33: #{encoder_forward.1} parent=1 // pred_fallthru
      _
    // Predicated region
    $region34: #{encoder_forward.1} parent=1 // pred_check
      _
    $region35: #{encoder_forward.1} parent=1 // pred_check_branch
      %1977 = sbr.rel (0) target = $region37
    $region36: #{encoder_forward.1} parent=1 // pred_region
      %s1979 = ssub.s32 256, 256
      %1980 = vsyncadd [#allocation6], %s1979
      %s1981 = sshll.u32 [#allocation5], 4
      %s1982 = int_to_ptr.vmem [resolvable:$true] %s1981
      %1987 = dma.vmem_to_hbm [thread:$0]  %s1982, 256, %s8, [#allocation6], 128, 128, 8
    $region37: #{encoder_forward.1} parent=1 // pred_fallthru
      _
    // Predicated region
    $region38: #{encoder_forward.1} parent=1 // pred_check
      _
    $region39: #{encoder_forward.1} parent=1 // pred_check_branch
      %1989 = sbr.rel (0) target = $region41
    $region40: #{encoder_forward.1} parent=1 // pred_region
      %1990 = dma.done [#allocation4], 256
    $region41: #{encoder_forward.1} parent=1 // pred_fallthru
      _
    // Predicated region
    $region42: #{encoder_forward.1} parent=1 // pred_check
      _
    $region43: #{encoder_forward.1} parent=1 // pred_check_branch
      %1992 = sbr.rel (0) target = $region45
    $region44: #{encoder_forward.1} parent=1 // pred_region
      %1993 = dma.done [#allocation6], 256
    $region45: #{encoder_forward.1} parent=1 // pred_fallthru
      _
    %1994 = vsyncpa [#allocation4], 1
    %1995 = vsyncpa [#allocation6], 1

</llo_original>
